<compile_context>
chip_gen: v5e
topology: v5e:2x2
jax: 0.10.0
libtpu: 0.0.40
codegen_flags: <defaults>
</compile_context>

<pallas_src>
import jax
import jax.numpy as jnp
from jax.experimental import pallas as pl
from jax.experimental.pallas import tpu as pltpu

LANE = 128


def _round_up(x, m):
    return ((x + m - 1) // m) * m


# ----------------------------------------------------------------------------
# Pallas kernel: fused (3x3 conv via 9 in-kernel taps) -> +bias -> ReLU -> 1x1
# ----------------------------------------------------------------------------
def _seg_head_kernel(xt_ref, w1_ref, b1_ref, w2_ref, b2_ref, out_ref):
    # xt_ref : (1, 1, tile_h+2, W+2, Cin)  NHWC halo tile (bf16)
    # w1_ref : (9*Cin, CHID_P)             3x3 weights, (dy,dx,cin) rows, zero-padded cols
    # b1_ref : (1, CHID_P)
    # w2_ref : (CHID_P, NCLS_P)            1x1 classifier, zero-padded
    # b2_ref : (1, NCLS_P)
    # out_ref: (1, tile_h*W, NCLS_P)       lane-dense (128-wide) output slab
    th = xt_ref.shape[2] - 2
    w = xt_ref.shape[3] - 2
    cin = xt_ref.shape[4]
    chid_p = w1_ref.shape[1]
    hw = th * w

    xt = xt_ref[0, 0]                                  # (th+2, w+2, cin)

    # In-kernel "im2col": 9 statically shifted views of the halo tile, each
    # contracted against its tap's weight rows and accumulated in f32.
    # No 9x-inflated patch slab ever touches HBM.
    h = jnp.zeros((hw, chid_p), jnp.float32)
    tap = 0
    for dy in range(3):
        for dx in range(3):
            v = xt[dy:dy + th, dx:dx + w, :].reshape(hw, cin)
            w_tap = w1_ref[tap * cin:(tap + 1) * cin, :]
            h = h + jnp.dot(v, w_tap, preferred_element_type=jnp.float32)
            tap += 1

    h = jnp.maximum(h + b1_ref[...].astype(jnp.float32), 0.0)      # bias + ReLU
    # Keep the classifier matmul in f32 (accuracy; K=N=128 so MXU-friendly).
    o = jnp.dot(h, w2_ref[...].astype(jnp.float32),
                preferred_element_type=jnp.float32)
    o = o + b2_ref[...].astype(jnp.float32)
    out_ref[0] = o.astype(out_ref.dtype)


def _choose_tile_h(H, W, cin, chid_p, ncls_p, vmem_budget_bytes=24 * 1024 * 1024):
    """Largest tile_h dividing H whose working set fits a conservative VMEM budget
    (sized so it also fits v7x's 64 MiB VMEM with double-buffering headroom)."""
    per_row = W * (2 * 2 * cin + 2 * 2 * ncls_p + 4 * chid_p)  # bf16 in/out x2 bufs + f32 hidden
    max_rows = max(1, vmem_budget_bytes // max(per_row, 1))
    for th in range(min(H, max_rows), 0, -1):
        if H % th == 0 and (th == H or (th * W) % 8 == 0):
            return th
    return H


def seg_head_forward(x_nchw, w1_p, b1_p, w2_p, b2_p, *, tile_h=None):
    """Fused Pallas head. x_nchw: (B, Cin, H, W) -> NHWC (B, H, W, NCLS_P) padded-class output."""
    B, Cin, H, W = x_nchw.shape
    K9, CHID_P = w1_p.shape
    NCLS_P = w2_p.shape[1]
    assert K9 == 9 * Cin

    if tile_h is None:
        tile_h = _choose_tile_h(H, W, Cin, CHID_P, NCLS_P)
    assert H % tile_h == 0, "tile_h must divide H"
    n_t = H // tile_h
    assert n_t == 1 or (tile_h * W) % 8 == 0, "row tile must be sublane aligned"
    hw_tile = tile_h * W

    # Single layout pass at the API boundary: NCHW -> NHWC, 'same' padding,
    # then halo row-tiles (only +2 rows/tile of redundancy, no 9x im2col).
    x_nhwc = jnp.transpose(x_nchw, (0, 2, 3, 1))
    xp = jnp.pad(x_nhwc, ((0, 0), (1, 1), (1, 1), (0, 0)))
    xt = jnp.stack(
        [xp[:, t * tile_h: t * tile_h + tile_h + 2] for t in range(n_t)], axis=1
    )                                                   # (B, n_t, tile_h+2, W+2, Cin)

    itemsize = jnp.dtype(x_nchw.dtype).itemsize
    flops = 2 * B * H * W * (K9 * CHID_P + CHID_P * NCLS_P)
    bytes_accessed = int(
        xt.size * itemsize
        + B * H * W * NCLS_P * itemsize
        + (w1_p.size + b1_p.size + w2_p.size + b2_p.size) * itemsize
    )

    out_flat = pl.pallas_call(
        _seg_head_kernel,
        out_shape=jax.ShapeDtypeStruct((B, H * W, NCLS_P), x_nchw.dtype),
        grid=(B, n_t),
        in_specs=[
            # halo tile of activations; weights/biases stay VMEM-resident
            # (constant index maps). TODO(synk): consider pipeline_mode=
            # pl.Buffered(3) on this spec for v7x once tiles are small.
            pl.BlockSpec((1, 1, tile_h + 2, W + 2, Cin),
                         lambda b, t: (b, t, 0, 0, 0)),
            pl.BlockSpec((K9, CHID_P), lambda b, t: (0, 0)),
            pl.BlockSpec((1, CHID_P), lambda b, t: (0, 0)),
            pl.BlockSpec((CHID_P, NCLS_P), lambda b, t: (0, 0)),
            pl.BlockSpec((1, NCLS_P), lambda b, t: (0, 0)),
        ],
        out_specs=pl.BlockSpec((1, hw_tile, NCLS_P), lambda b, t: (b, t, 0)),
        compiler_params=pltpu.CompilerParams(
            dimension_semantics=("parallel", "parallel"),
            vmem_limit_bytes=48 * 1024 * 1024),
        cost_estimate=pl.CostEstimate(
            flops=int(flops), transcendentals=0, bytes_accessed=bytes_accessed),
    )(xt, w1_p, b1_p, w2_p, b2_p)

    return out_flat.reshape(B, H, W, NCLS_P)            # NHWC, padded classes


# ----------------------------------------------------------------------------
# Synthetic inner model (returns a dict, like torchvision segmentation models)
# and the ModelWrapper that extracts ['out'].
# ----------------------------------------------------------------------------
class SegModel:
    def __init__(self, key, cin, chid, ncls, dtype=jnp.bfloat16, tile_h=None):
        k1, k2, k3, k4 = jax.random.split(key, 4)
        self.cin, self.chid, self.ncls, self.tile_h = cin, chid, ncls, tile_h
        # weights laid out (dy, dx, Cin, Cout) to match the tap ordering
        self.w1 = (0.1 * jax.random.normal(k1, (3, 3, cin, chid), jnp.float32)).astype(dtype)
        self.b1 = (0.1 * jax.random.normal(k2, (chid,), jnp.float32)).astype(dtype)
        self.w2 = (0.1 * jax.random.normal(k3, (chid, ncls), jnp.float32)).astype(dtype)
        self.b2 = (0.1 * jax.random.normal(k4, (ncls,), jnp.float32)).astype(dtype)

        # Zero-pad hidden/class dims to 128 lanes once at init (lane-dense
        # stores + full MXU columns; zero padding cannot contaminate outputs).
        chid_p = _round_up(chid, LANE)
        ncls_p = _round_up(ncls, LANE)
        self.ncls_p = ncls_p
        w1_flat = self.w1.reshape(9 * cin, chid)
        self.w1_p = jnp.pad(w1_flat, ((0, 0), (0, chid_p - chid)))
        self.b1_p = jnp.pad(self.b1.reshape(1, chid), ((0, 0), (0, chid_p - chid)))
        self.w2_p = jnp.pad(self.w2, ((0, chid_p - chid), (0, ncls_p - ncls)))
        self.b2_p = jnp.pad(self.b2.reshape(1, ncls), ((0, 0), (0, ncls_p - ncls)))

    def __call__(self, x_nchw):
        out_nhwc_p = seg_head_forward(
            x_nchw, self.w1_p, self.b1_p, self.w2_p, self.b2_p, tile_h=self.tile_h)
        out_nhwc = out_nhwc_p[..., :self.ncls]          # drop padded classes
        out = jnp.transpose(out_nhwc, (0, 3, 1, 2))     # NHWC -> NCHW (API boundary only)
        return {"out": out, "aux": out}


class ModelWrapper:
    """JAX equivalent of the PyTorch ModelWrapper: forward(x) -> model(x)['out']."""

    def __init__(self, model):
        self.model = model

    def __call__(self, x):
        return self.model(x)["out"]


# ----------------------------------------------------------------------------
def _im2col_3x3(x_nhwc):
    B, H, W, C = x_nhwc.shape
    xp = jnp.pad(x_nhwc, ((0, 0), (1, 1), (1, 1), (0, 0)))
    cols = [xp[:, dy:dy + H, dx:dx + W, :] for dy in range(3) for dx in range(3)]
    return jnp.concatenate(cols, axis=-1).reshape(B, H * W, 9 * C)


def _reference(x_nchw, w1, b1, w2, b2):
    """Pure-JAX reference (same math, no Pallas) for a correctness sanity check."""
    B, Cin, H, W = x_nchw.shape
    x_cols = _im2col_3x3(jnp.transpose(x_nchw, (0, 2, 3, 1))).astype(jnp.float32)
    h = jnp.maximum(x_cols @ w1.reshape(-1, w1.shape[-1]).astype(jnp.float32)
                    + b1.astype(jnp.float32), 0.0)
    o = h @ w2.astype(jnp.float32) + b2.astype(jnp.float32)
    o = o.reshape(B, H, W, -1)
    return jnp.transpose(o, (0, 3, 1, 2))


if __name__ == "__main__":
    B, Cin, H, W = 2, 4, 16, 16
    Chid, Ncls = 8, 8

    key = jax.random.PRNGKey(0)
    k_x, k_m = jax.random.split(key)
    # mirror `.half()` precision with bfloat16 activations/weights
    x = jax.random.normal(k_x, (B, Cin, H, W), jnp.float32).astype(jnp.bfloat16)

    # tile_h=8 -> grid (B, 2): exercises the multi-row-tile path at toy size
    model = SegModel(k_m, Cin, Chid, Ncls, tile_h=8)
    wrapper = ModelWrapper(model)

    out = wrapper(x)
    out = jax.block_until_ready(out)
    assert out.shape == (B, Ncls, H, W), out.shape
    assert out.dtype == jnp.bfloat16, out.dtype

    ref = _reference(x, model.w1, model.b1, model.w2, model.b2)
    assert jnp.allclose(out.astype(jnp.float32), ref, atol=5e-2, rtol=5e-2)

    print("KERNEL_OK")
</pallas_src>

<mosaic_0001>
module attributes {stable_mosaic.version = 11 : i64} {
  func.func @_seg_head_kernel(%arg0: i32, %arg1: i32, %arg2: memref<1x1x10x18x4xbf16, #tpu.memory_space<vmem>>, %arg3: memref<36x128xbf16, #tpu.memory_space<vmem>>, %arg4: memref<1x128xbf16, #tpu.memory_space<vmem>>, %arg5: memref<128x128xbf16, #tpu.memory_space<vmem>>, %arg6: memref<1x128xbf16, #tpu.memory_space<vmem>>, %arg7: memref<1x128x128xbf16, #tpu.memory_space<vmem>>) attributes {dimension_semantics = [#tpu.dimension_semantics<parallel>, #tpu.dimension_semantics<parallel>], iteration_bounds = array<i64: 2, 2>, scalar_prefetch = 0 : i64, scratch_operands = 0 : i64, tpu.core_type = #tpu.core_type<tc>, window_params = [{transform_indices = @transform_0, window_bounds = array<i64: 1, 1, 10, 18, 4>}, {pipeline_mode = #tpu.pipeline_mode<synchronous>, transform_indices = @transform_1, window_bounds = array<i64: 36, 128>}, {pipeline_mode = #tpu.pipeline_mode<synchronous>, transform_indices = @transform_2, window_bounds = array<i64: 1, 128>}, {pipeline_mode = #tpu.pipeline_mode<synchronous>, transform_indices = @transform_3, window_bounds = array<i64: 128, 128>}, {pipeline_mode = #tpu.pipeline_mode<synchronous>, transform_indices = @transform_4, window_bounds = array<i64: 1, 128>}, {transform_indices = @transform_5, window_bounds = array<i64: 1, 128, 128>}]} {
    %c0 = arith.constant 0 : index
    %c0_0 = arith.constant 0 : index
    %c0_1 = arith.constant 0 : index
    %c0_2 = arith.constant 0 : index
    %c0_3 = arith.constant 0 : index
    %0 = vector.load %arg2[%c0, %c0_0, %c0_1, %c0_2, %c0_3] : memref<1x1x10x18x4xbf16, #tpu.memory_space<vmem>>, vector<1x1x10x18x4xbf16>
    %1 = vector.shape_cast %0 : vector<1x1x10x18x4xbf16> to vector<10x18x4xbf16>
    %cst = arith.constant 0.000000e+00 : f32
    %2 = vector.broadcast %cst : f32 to vector<128x128xf32>
    %3 = vector.extract_strided_slice %1 {offsets = [0, 0, 0], sizes = [8, 16, 4], strides = [1, 1, 1]} : vector<10x18x4xbf16> to vector<8x16x4xbf16>
    %4 = vector.shape_cast %3 : vector<8x16x4xbf16> to vector<128x4xbf16>
    %c0_4 = arith.constant 0 : index
    %c0_5 = arith.constant 0 : index
    %5 = vector.load %arg3[%c0_4, %c0_5] : memref<36x128xbf16, #tpu.memory_space<vmem>>, vector<4x128xbf16>
    %cst_6 = arith.constant dense<0.000000e+00> : vector<128x128xf32>
    %6 = tpu.matmul %4, %5, %cst_6 {dimension_numbers = #tpu.dot_dimension_numbers<[1], [0], [0], [1], [0, 0, 1, 1], [], []>} : vector<128x4xbf16>, vector<4x128xbf16>, vector<128x128xf32> -> vector<128x128xf32>
    %7 = arith.addf %2, %6 : vector<128x128xf32>
    %8 = vector.extract_strided_slice %1 {offsets = [0, 1, 0], sizes = [8, 16, 4], strides = [1, 1, 1]} : vector<10x18x4xbf16> to vector<8x16x4xbf16>
    %9 = vector.shape_cast %8 : vector<8x16x4xbf16> to vector<128x4xbf16>
    %c4 = arith.constant 4 : index
    %c0_7 = arith.constant 0 : index
    %10 = vector.load %arg3[%c4, %c0_7] : memref<36x128xbf16, #tpu.memory_space<vmem>>, vector<4x128xbf16>
    %cst_8 = arith.constant dense<0.000000e+00> : vector<128x128xf32>
    %11 = tpu.matmul %9, %10, %cst_8 {dimension_numbers = #tpu.dot_dimension_numbers<[1], [0], [0], [1], [0, 0, 1, 1], [], []>} : vector<128x4xbf16>, vector<4x128xbf16>, vector<128x128xf32> -> vector<128x128xf32>
    %12 = arith.addf %7, %11 : vector<128x128xf32>
    %13 = vector.extract_strided_slice %1 {offsets = [0, 2, 0], sizes = [8, 16, 4], strides = [1, 1, 1]} : vector<10x18x4xbf16> to vector<8x16x4xbf16>
    %14 = vector.shape_cast %13 : vector<8x16x4xbf16> to vector<128x4xbf16>
    %c8 = arith.constant 8 : index
    %c0_9 = arith.constant 0 : index
    %15 = vector.load %arg3[%c8, %c0_9] : memref<36x128xbf16, #tpu.memory_space<vmem>>, vector<4x128xbf16>
    %cst_10 = arith.constant dense<0.000000e+00> : vector<128x128xf32>
    %16 = tpu.matmul %14, %15, %cst_10 {dimension_numbers = #tpu.dot_dimension_numbers<[1], [0], [0], [1], [0, 0, 1, 1], [], []>} : vector<128x4xbf16>, vector<4x128xbf16>, vector<128x128xf32> -> vector<128x128xf32>
    %17 = arith.addf %12, %16 : vector<128x128xf32>
    %18 = vector.extract_strided_slice %1 {offsets = [1, 0, 0], sizes = [8, 16, 4], strides = [1, 1, 1]} : vector<10x18x4xbf16> to vector<8x16x4xbf16>
    %19 = vector.shape_cast %18 : vector<8x16x4xbf16> to vector<128x4xbf16>
    %c12 = arith.constant 12 : index
    %c0_11 = arith.constant 0 : index
    %20 = vector.load %arg3[%c12, %c0_11] : memref<36x128xbf16, #tpu.memory_space<vmem>>, vector<4x128xbf16>
    %cst_12 = arith.constant dense<0.000000e+00> : vector<128x128xf32>
    %21 = tpu.matmul %19, %20, %cst_12 {dimension_numbers = #tpu.dot_dimension_numbers<[1], [0], [0], [1], [0, 0, 1, 1], [], []>} : vector<128x4xbf16>, vector<4x128xbf16>, vector<128x128xf32> -> vector<128x128xf32>
    %22 = arith.addf %17, %21 : vector<128x128xf32>
    %23 = vector.extract_strided_slice %1 {offsets = [1, 1, 0], sizes = [8, 16, 4], strides = [1, 1, 1]} : vector<10x18x4xbf16> to vector<8x16x4xbf16>
    %24 = vector.shape_cast %23 : vector<8x16x4xbf16> to vector<128x4xbf16>
    %c16 = arith.constant 16 : index
    %c0_13 = arith.constant 0 : index
    %25 = vector.load %arg3[%c16, %c0_13] : memref<36x128xbf16, #tpu.memory_space<vmem>>, vector<4x128xbf16>
    %cst_14 = arith.constant dense<0.000000e+00> : vector<128x128xf32>
    %26 = tpu.matmul %24, %25, %cst_14 {dimension_numbers = #tpu.dot_dimension_numbers<[1], [0], [0], [1], [0, 0, 1, 1], [], []>} : vector<128x4xbf16>, vector<4x128xbf16>, vector<128x128xf32> -> vector<128x128xf32>
    %27 = arith.addf %22, %26 : vector<128x128xf32>
    %28 = vector.extract_strided_slice %1 {offsets = [1, 2, 0], sizes = [8, 16, 4], strides = [1, 1, 1]} : vector<10x18x4xbf16> to vector<8x16x4xbf16>
    %29 = vector.shape_cast %28 : vector<8x16x4xbf16> to vector<128x4xbf16>
    %c20 = arith.constant 20 : index
    %c0_15 = arith.constant 0 : index
    %30 = vector.load %arg3[%c20, %c0_15] : memref<36x128xbf16, #tpu.memory_space<vmem>>, vector<4x128xbf16>
    %cst_16 = arith.constant dense<0.000000e+00> : vector<128x128xf32>
    %31 = tpu.matmul %29, %30, %cst_16 {dimension_numbers = #tpu.dot_dimension_numbers<[1], [0], [0], [1], [0, 0, 1, 1], [], []>} : vector<128x4xbf16>, vector<4x128xbf16>, vector<128x128xf32> -> vector<128x128xf32>
    %32 = arith.addf %27, %31 : vector<128x128xf32>
    %33 = vector.extract_strided_slice %1 {offsets = [2, 0, 0], sizes = [8, 16, 4], strides = [1, 1, 1]} : vector<10x18x4xbf16> to vector<8x16x4xbf16>
    %34 = vector.shape_cast %33 : vector<8x16x4xbf16> to vector<128x4xbf16>
    %c24 = arith.constant 24 : index
    %c0_17 = arith.constant 0 : index
    %35 = vector.load %arg3[%c24, %c0_17] : memref<36x128xbf16, #tpu.memory_space<vmem>>, vector<4x128xbf16>
    %cst_18 = arith.constant dense<0.000000e+00> : vector<128x128xf32>
    %36 = tpu.matmul %34, %35, %cst_18 {dimension_numbers = #tpu.dot_dimension_numbers<[1], [0], [0], [1], [0, 0, 1, 1], [], []>} : vector<128x4xbf16>, vector<4x128xbf16>, vector<128x128xf32> -> vector<128x128xf32>
    %37 = arith.addf %32, %36 : vector<128x128xf32>
    %38 = vector.extract_strided_slice %1 {offsets = [2, 1, 0], sizes = [8, 16, 4], strides = [1, 1, 1]} : vector<10x18x4xbf16> to vector<8x16x4xbf16>
    %39 = vector.shape_cast %38 : vector<8x16x4xbf16> to vector<128x4xbf16>
    %c28 = arith.constant 28 : index
    %c0_19 = arith.constant 0 : index
    %40 = vector.load %arg3[%c28, %c0_19] : memref<36x128xbf16, #tpu.memory_space<vmem>>, vector<4x128xbf16>
    %cst_20 = arith.constant dense<0.000000e+00> : vector<128x128xf32>
    %41 = tpu.matmul %39, %40, %cst_20 {dimension_numbers = #tpu.dot_dimension_numbers<[1], [0], [0], [1], [0, 0, 1, 1], [], []>} : vector<128x4xbf16>, vector<4x128xbf16>, vector<128x128xf32> -> vector<128x128xf32>
    %42 = arith.addf %37, %41 : vector<128x128xf32>
    %43 = vector.extract_strided_slice %1 {offsets = [2, 2, 0], sizes = [8, 16, 4], strides = [1, 1, 1]} : vector<10x18x4xbf16> to vector<8x16x4xbf16>
    %44 = vector.shape_cast %43 : vector<8x16x4xbf16> to vector<128x4xbf16>
    %c32 = arith.constant 32 : index
    %c0_21 = arith.constant 0 : index
    %45 = vector.load %arg3[%c32, %c0_21] : memref<36x128xbf16, #tpu.memory_space<vmem>>, vector<4x128xbf16>
    %cst_22 = arith.constant dense<0.000000e+00> : vector<128x128xf32>
    %46 = tpu.matmul %44, %45, %cst_22 {dimension_numbers = #tpu.dot_dimension_numbers<[1], [0], [0], [1], [0, 0, 1, 1], [], []>} : vector<128x4xbf16>, vector<4x128xbf16>, vector<128x128xf32> -> vector<128x128xf32>
    %47 = arith.addf %42, %46 : vector<128x128xf32>
    %c0_23 = arith.constant 0 : index
    %c0_24 = arith.constant 0 : index
    %48 = vector.load %arg4[%c0_23, %c0_24] : memref<1x128xbf16, #tpu.memory_space<vmem>>, vector<1x128xbf16>
    %49 = arith.extf %48 : vector<1x128xbf16> to vector<1x128xf32>
    %50 = vector.broadcast %49 : vector<1x128xf32> to vector<128x128xf32>
    %51 = arith.addf %47, %50 : vector<128x128xf32>
    %cst_25 = arith.constant 0.000000e+00 : f32
    %52 = vector.broadcast %cst_25 : f32 to vector<128x128xf32>
    %53 = arith.maximumf %51, %52 : vector<128x128xf32>
    %c0_26 = arith.constant 0 : index
    %c0_27 = arith.constant 0 : index
    %54 = vector.load %arg5[%c0_26, %c0_27] : memref<128x128xbf16, #tpu.memory_space<vmem>>, vector<128x128xbf16>
    %55 = arith.extf %54 : vector<128x128xbf16> to vector<128x128xf32>
    %cst_28 = arith.constant dense<0.000000e+00> : vector<128x128xf32>
    %56 = tpu.matmul %53, %55, %cst_28 {dimension_numbers = #tpu.dot_dimension_numbers<[1], [0], [0], [1], [0, 0, 1, 1], [], []>} : vector<128x128xf32>, vector<128x128xf32>, vector<128x128xf32> -> vector<128x128xf32>
    %c0_29 = arith.constant 0 : index
    %c0_30 = arith.constant 0 : index
    %57 = vector.load %arg6[%c0_29, %c0_30] : memref<1x128xbf16, #tpu.memory_space<vmem>>, vector<1x128xbf16>
    %58 = arith.extf %57 : vector<1x128xbf16> to vector<1x128xf32>
    %59 = vector.broadcast %58 : vector<1x128xf32> to vector<128x128xf32>
    %60 = arith.addf %56, %59 : vector<128x128xf32>
    %61 = arith.truncf %60 : vector<128x128xf32> to vector<128x128xbf16>
    %c0_31 = arith.constant 0 : index
    %c0_32 = arith.constant 0 : index
    %c0_33 = arith.constant 0 : index
    %62 = vector.load %arg7[%c0_31, %c0_32, %c0_33] : memref<1x128x128xbf16, #tpu.memory_space<vmem>>, vector<1x128x128xbf16>
    %63 = vector.shape_cast %62 : vector<1x128x128xbf16> to vector<128x128xbf16>
    %64 = vector.shape_cast %61 : vector<128x128xbf16> to vector<1x128x128xbf16>
    tpu.vector_store %arg7[%c0_31, %c0_32, %c0_33], %64 {strides = array<i32>} : memref<1x128x128xbf16, #tpu.memory_space<vmem>>, vector<1x128x128xbf16>,
    return
  }
  func.func @transform_0(%arg0: i32, %arg1: i32) -> (i32, i32, i32, i32, i32) {
    %c0_i32 = arith.constant 0 : i32
    %c0_i32_0 = arith.constant 0 : i32
    %c0_i32_1 = arith.constant 0 : i32
    %c0_i32_2 = arith.constant 0 : i32
    return %arg0, %arg1, %c0_i32, %c0_i32_0, %c0_i32_1 : i32, i32, i32, i32, i32
  }
  func.func @transform_1(%arg0: i32, %arg1: i32) -> (i32, i32) {
    %c0_i32 = arith.constant 0 : i32
    %c0_i32_0 = arith.constant 0 : i32
    %c0_i32_1 = arith.constant 0 : i32
    return %c0_i32, %c0_i32_0 : i32, i32
  }
  func.func @transform_2(%arg0: i32, %arg1: i32) -> (i32, i32) {
    %c0_i32 = arith.constant 0 : i32
    %c0_i32_0 = arith.constant 0 : i32
    %c0_i32_1 = arith.constant 0 : i32
    return %c0_i32, %c0_i32_0 : i32, i32
  }
  func.func @transform_3(%arg0: i32, %arg1: i32) -> (i32, i32) {
    %c0_i32 = arith.constant 0 : i32
    %c0_i32_0 = arith.constant 0 : i32
    %c0_i32_1 = arith.constant 0 : i32
    return %c0_i32, %c0_i32_0 : i32, i32
  }
  func.func @transform_4(%arg0: i32, %arg1: i32) -> (i32, i32) {
    %c0_i32 = arith.constant 0 : i32
    %c0_i32_0 = arith.constant 0 : i32
    %c0_i32_1 = arith.constant 0 : i32
    return %c0_i32, %c0_i32_0 : i32, i32
  }
  func.func @transform_5(%arg0: i32, %arg1: i32) -> (i32, i32, i32) {
    %c0_i32 = arith.constant 0 : i32
    %c0_i32_0 = arith.constant 0 : i32
    return %arg0, %arg1, %c0_i32 : i32, i32, i32
  }
}

</mosaic_0001>

<llo_original>
// kernel: tpu_custom_call.1
$region0: #{tpu_custom_call.1}
  #allocation0 [shape = 'u32[]', space=smem, size = 0x4, offset = 0x4, fixed_abs, tag = 'smem constant byte address 0x4 - core index']
  #allocation1 [shape = 'u32[72,128]{1,0:T(1,128)}', space=vmem, size = 0x9000, scoped, tag = 'internal scratch']
  %s0 = inlined_call_operand.vmem [shape: bf16[2,2,10,18,4], index: 0, kind: input, shape index: {}]
  %s1 = inlined_call_operand.vmem [shape: bf16[36,128], index: 1, kind: input, shape index: {}]
  %s2 = inlined_call_operand.vmem [shape: bf16[1,128], index: 2, kind: input, shape index: {}]
  %s3 = inlined_call_operand.vmem [shape: bf16[128,128], index: 3, kind: input, shape index: {}]
  %s4 = inlined_call_operand.vmem [shape: bf16[1,128], index: 4, kind: input, shape index: {}]
  %s5 = inlined_call_operand.hbm [shape: bf16[2,256,128], index: 5, kind: output, shape index: {}]
  %s6 = sld [smem:[#allocation0]]
  $region53: #{tpu_custom_call.1} parent=0
    _
  %s8 = ssub.s32 1, %s6
  %s9 = scalar_select 0, %s8, %s6
  $region1: #{tpu_custom_call.1} parent=0
    #allocation2 [shape = 'u8[65536]{0}', space=vmem, size = 0x10000, scoped, tag = 'output window, operand 0']
    #allocation3 [shape = 's32[2]{0}', space=sflag, size = 0x8, scoped, tag = 'scoped memory for tpu_custom_call.1']
    %10 = vsyncpa [#allocation3], 0
    %s11 = scalar_lea.sflag [#allocation3], 1
    %12 = vsyncpa %s11, 0
    loop: start=0, step=1, limit=6
    $region2: #{tpu_custom_call.1} parent=1 // loop_pre_header
      _
    $region3: #{tpu_custom_call.1} parent=1 // loop_header
      %s14 = sphi 0, %s18
      %p15 = scmp.ge.s32.totalorder %s14, 6
      %s21 = sphi 0, %s33
      %s22 = sphi 0, %s29
      %s23 = sphi 0, %s21
      %s24 = sphi 0, %s22
      %s25 = sphi 0, %s23
      %s26 = sphi 0, %s24
      %s38 = sphi 0, %s40
      %s41 = sphi 0, %s38
      %s42 = sphi 0, %s41
      %s58 = sphi 0, %s42
      %s62 = sphi 0, %s62
      %s64 = sphi 0, %s62
      %s65 = sphi 0, %s64
      %s79 = sphi 0, %s65
      %s83 = sphi 0, %s83
      %s85 = sphi 0, %s83
      %s86 = sphi 0, %s85
      %s100 = sphi 0, %s86
      %s104 = sphi 0, %s104
      %s106 = sphi 0, %s104
      %s107 = sphi 0, %s106
      %s121 = sphi 0, %s107
      %s125 = sphi 0, %s125
      %s127 = sphi 0, %s125
      %s128 = sphi 0, %s127
      %s142 = sphi 0, %s128
      %s150 = sphi 0, %s152
      %s153 = sphi 0, %s150
      %s154 = sphi 0, %s153
      %s170 = sphi 0, %s154
    $region4: #{tpu_custom_call.1} parent=1 // loop_header_branch
      %17 = sbr.rel (%p15) target = $region8
    $region5: #{tpu_custom_call.1} parent=1 // loop_body
      %s19 = ssub.s32 %s14, 1
      %s20 = ssub.s32 %s14, 2
      %s27 = sadd.s32 1, %s22
      %p28 = scmp.ge.s32.totalorder %s27, 2
      %s29 = scalar_select %p28, 0, %s27
      %s30 = sadd.s32 1, %s21
      %s31 = scalar_select %p28, %s30, %s21
      %p32 = scmp.ge.s32.totalorder %s31, 2
      %s33 = scalar_select %p32, 0, %s31
      %s34 = ssub.s32 %s21, %s33
      %s35 = ssub.s32 %s22, %s29
      %s36 = sor.u32 %s34, %s35
      %p37 = scmp.eq.s32.totalorder %s36, 0
      %s39 = sadd.s32 %s38, 1
      %s40 = scalar_select %p37, %s38, %s39
      %p43 = pneg %p37
      %p44 = scmp.eq.s32.totalorder %s14, 3
      %p45 = por %p43, %p44
      %p46 = scmp.ne.s32.totalorder %s38, %s41
      %p47 = scmp.eq.s32.totalorder %s14, 0
      %p48 = por %p46, %p47
      %p49 = scmp.ne.s32.totalorder %s38, %s41
      %p50 = scmp.eq.s32.totalorder %s19, 3
      %p51 = por %p49, %p50
      %p52 = scmp.ne.s32.totalorder %s41, %s42
      %p53 = scmp.eq.s32.totalorder %s19, 0
      %p54 = por %p52, %p53
      %p55 = scmp.ne.s32.totalorder %s41, %s42
      %p56 = scmp.eq.s32.totalorder %s20, 3
      %p57 = por %p55, %p56
      %p59 = scmp.ne.s32.totalorder %s42, %s58
      %p60 = scmp.eq.s32.totalorder %s20, 0
      %p61 = por %p59, %p60
      %s63 = sadd.s32 %s62, 1
      %p66 = scmp.eq.s32.totalorder %s14, 3
      %p67 = scmp.ne.s32.totalorder %s62, %s64
      %p68 = scmp.eq.s32.totalorder %s14, 0
      %p69 = por %p67, %p68
      %p70 = scmp.ne.s32.totalorder %s62, %s64
      %p71 = scmp.eq.s32.totalorder %s19, 3
      %p72 = por %p70, %p71
      %p73 = scmp.ne.s32.totalorder %s64, %s65
      %p74 = scmp.eq.s32.totalorder %s19, 0
      %p75 = por %p73, %p74
      %p76 = scmp.ne.s32.totalorder %s64, %s65
      %p77 = scmp.eq.s32.totalorder %s20, 3
      %p78 = por %p76, %p77
      %p80 = scmp.ne.s32.totalorder %s65, %s79
      %p81 = scmp.eq.s32.totalorder %s20, 0
      %p82 = por %p80, %p81
      %s84 = sadd.s32 %s83, 1
      %p87 = scmp.eq.s32.totalorder %s14, 3
      %p88 = scmp.ne.s32.totalorder %s83, %s85
      %p89 = scmp.eq.s32.totalorder %s14, 0
      %p90 = por %p88, %p89
      %p91 = scmp.ne.s32.totalorder %s83, %s85
      %p92 = scmp.eq.s32.totalorder %s19, 3
      %p93 = por %p91, %p92
      %p94 = scmp.ne.s32.totalorder %s85, %s86
      %p95 = scmp.eq.s32.totalorder %s19, 0
      %p96 = por %p94, %p95
      %p97 = scmp.ne.s32.totalorder %s85, %s86
      %p98 = scmp.eq.s32.totalorder %s20, 3
      %p99 = por %p97, %p98
      %p101 = scmp.ne.s32.totalorder %s86, %s100
      %p102 = scmp.eq.s32.totalorder %s20, 0
      %p103 = por %p101, %p102
      %s105 = sadd.s32 %s104, 1
      %p108 = scmp.eq.s32.totalorder %s14, 3
      %p109 = scmp.ne.s32.totalorder %s104, %s106
      %p110 = scmp.eq.s32.totalorder %s14, 0
      %p111 = por %p109, %p110
      %p112 = scmp.ne.s32.totalorder %s104, %s106
      %p113 = scmp.eq.s32.totalorder %s19, 3
      %p114 = por %p112, %p113
      %p115 = scmp.ne.s32.totalorder %s106, %s107
      %p116 = scmp.eq.s32.totalorder %s19, 0
      %p117 = por %p115, %p116
      %p118 = scmp.ne.s32.totalorder %s106, %s107
      %p119 = scmp.eq.s32.totalorder %s20, 3
      %p120 = por %p118, %p119
      %p122 = scmp.ne.s32.totalorder %s107, %s121
      %p123 = scmp.eq.s32.totalorder %s20, 0
      %p124 = por %p122, %p123
      %s126 = sadd.s32 %s125, 1
      %p129 = scmp.eq.s32.totalorder %s14, 3
      %p130 = scmp.ne.s32.totalorder %s125, %s127
      %p131 = scmp.eq.s32.totalorder %s14, 0
      %p132 = por %p130, %p131
      %p133 = scmp.ne.s32.totalorder %s125, %s127
      %p134 = scmp.eq.s32.totalorder %s19, 3
      %p135 = por %p133, %p134
      %p136 = scmp.ne.s32.totalorder %s127, %s128
      %p137 = scmp.eq.s32.totalorder %s19, 0
      %p138 = por %p136, %p137
      %p139 = scmp.ne.s32.totalorder %s127, %s128
      %p140 = scmp.eq.s32.totalorder %s20, 3
      %p141 = por %p139, %p140
      %p143 = scmp.ne.s32.totalorder %s128, %s142
      %p144 = scmp.eq.s32.totalorder %s20, 0
      %p145 = por %p143, %p144
      %s146 = ssub.s32 %s21, %s33
      %s147 = ssub.s32 %s22, %s29
      %s148 = sor.u32 %s146, %s147
      %p149 = scmp.eq.s32.totalorder %s148, 0
      %s151 = sadd.s32 %s150, 1
      %s152 = scalar_select %p149, %s150, %s151
      %p155 = pneg %p149
      %p156 = scmp.eq.s32.totalorder %s14, 3
      %p157 = por %p155, %p156
      %p158 = scmp.ne.s32.totalorder %s150, %s153
      %p159 = scmp.eq.s32.totalorder %s14, 0
      %p160 = por %p158, %p159
      %p161 = scmp.ne.s32.totalorder %s150, %s153
      %p162 = scmp.eq.s32.totalorder %s19, 3
      %p163 = por %p161, %p162
      %p164 = scmp.ne.s32.totalorder %s153, %s154
      %p165 = scmp.eq.s32.totalorder %s19, 0
      %p166 = por %p164, %p165
      %p167 = scmp.ne.s32.totalorder %s153, %s154
      %p168 = scmp.eq.s32.totalorder %s20, 3
      %p169 = por %p167, %p168
      %p171 = scmp.ne.s32.totalorder %s154, %s170
      %p172 = scmp.eq.s32.totalorder %s20, 0
      %p173 = por %p171, %p172
      %p174 = scmp.le.s32.totalorder 1, %s14
      %p175 = scmp.lt.s32.totalorder %s14, 5
      %p176 = pnand %p174, %p175
      %p177 = pneg %p176
      // Predicated region
      $region9: #{tpu_custom_call.1} parent=5 // pred_check
        _
      $region10: #{tpu_custom_call.1} parent=5 // pred_check_branch
        %179 = sbr.rel (%p176) target = $region12
      $region11: #{tpu_custom_call.1} parent=5 // pred_region
        %s180 = ssub.s32 %s14, 1
        // Predicated region
        $region13: #{tpu_custom_call.1} parent=11 // pred_check
          %p181 = pneg %p75
        $region14: #{tpu_custom_call.1} parent=11 // pred_check_branch
          %183 = sbr.rel (%p181) target = $region16
        $region15: #{tpu_custom_call.1} parent=11 // pred_region
          _
        $region16: #{tpu_custom_call.1} parent=11 // pred_fallthru
          _
        // Predicated region
        $region17: #{tpu_custom_call.1} parent=11 // pred_check
          %p184 = pneg %p96
        $region18: #{tpu_custom_call.1} parent=11 // pred_check_branch
          %186 = sbr.rel (%p184) target = $region20
        $region19: #{tpu_custom_call.1} parent=11 // pred_region
          _
        $region20: #{tpu_custom_call.1} parent=11 // pred_fallthru
          _
        // Predicated region
        $region21: #{tpu_custom_call.1} parent=11 // pred_check
          %p187 = pneg %p117
        $region22: #{tpu_custom_call.1} parent=11 // pred_check_branch
          %189 = sbr.rel (%p187) target = $region24
        $region23: #{tpu_custom_call.1} parent=11 // pred_region
          _
        $region24: #{tpu_custom_call.1} parent=11 // pred_fallthru
          _
        // Predicated region
        $region25: #{tpu_custom_call.1} parent=11 // pred_check
          %p190 = pneg %p138
        $region26: #{tpu_custom_call.1} parent=11 // pred_check_branch
          %192 = sbr.rel (%p190) target = $region28
        $region27: #{tpu_custom_call.1} parent=11 // pred_region
          _
        $region28: #{tpu_custom_call.1} parent=11 // pred_fallthru
          _
      $region12: #{tpu_custom_call.1} parent=5 // pred_fallthru
        _
      %p193 = scmp.lt.s32.totalorder %s14, 4
      // Predicated region
      $region29: #{tpu_custom_call.1} parent=5 // pred_check
        %p194 = pneg %p193
      $region30: #{tpu_custom_call.1} parent=5 // pred_check_branch
        %196 = sbr.rel (%p194) target = $region32
      $region31: #{tpu_custom_call.1} parent=5 // pred_region
        // Predicated region
        $region33: #{tpu_custom_call.1} parent=31 // pred_check
          %p197 = pneg %p48
        $region34: #{tpu_custom_call.1} parent=31 // pred_check_branch
          %199 = sbr.rel (%p197) target = $region36
        $region35: #{tpu_custom_call.1} parent=31 // pred_region
          %p200 = scmp.lt.s32.totalorder %s21, 1
          %s201 = scalar_select %p200, %s21, 1
          %p202 = scmp.lt.s32.totalorder %s22, 1
          %s203 = scalar_select %p202, %s22, 1
          %s204 = smul.addr %s203, 30
          %s205 = smul.addr %s201, 60
          %s206 = sadd.s32 %s204, %s205
          %s207 = smul.addr %s206, 4
          %s208 = scalar_lea.vmem %s0, %s207
        $region36: #{tpu_custom_call.1} parent=31 // pred_fallthru
          _
      $region32: #{tpu_custom_call.1} parent=5 // pred_fallthru
        _
      %p209 = scmp.le.s32.totalorder 1, %s14
      %p210 = scmp.lt.s32.totalorder %s14, 5
      %p211 = pnand %p209, %p210
      %p212 = pneg %p211
      // Predicated region
      $region37: #{tpu_custom_call.1} parent=5 // pred_check
        _
      $region38: #{tpu_custom_call.1} parent=5 // pred_check_branch
        %214 = sbr.rel (%p211) target = $region40
      $region39: #{tpu_custom_call.1} parent=5 // pred_region
        %s215 = ssub.s32 %s14, 1
        %p216 = scmp.lt.s32.totalorder %s23, 1
        %s217 = scalar_select %p216, %s23, 1
        %p218 = scmp.lt.s32.totalorder %s24, 1
        %s219 = scalar_select %p218, %s24, 1
        %s220 = smul.addr %s219, 30
        %s221 = smul.addr %s217, 60
        %s222 = sadd.s32 %s220, %s221
        %s223 = smul.addr %s222, 4
        %s224 = scalar_lea.vmem %s0, %s223
        %p225 = pneg %p54
        %p226 = pneg %p51
        %p227 = pneg %p75
        %p228 = pneg %p72
        %p229 = pneg %p96
        %p230 = pneg %p93
        %p231 = pneg %p117
        %p232 = pneg %p114
        %p233 = pneg %p138
        %p234 = pneg %p135
        %p235 = pneg %p166
        %p236 = pneg %p163
        %s237 = sand.u32 %s153, 1
        %s238 = scalar_lea.sflag [#allocation3], %s237
        %s239 = sand.u32 %s153, 1
        %s240 = smul.addr %s239, 64
        %s241 = scalar_lea.vmem [#allocation2], %s240
        %p242 = scmp.lt.s32.totalorder %s23, 1
        %s243 = scalar_select %p242, %s23, 1
        %p244 = scmp.lt.s32.totalorder %s24, 1
        %s245 = scalar_select %p244, %s24, 1
        %s246 = smul.addr %s245, 30
        %s247 = smul.addr %s243, 60
        %s248 = sadd.s32 %s246, %s247
        %s249 = smul.addr %s248, 4
        %s250 = scalar_lea.vmem %s0, %s249
        %s251 = smul.u32 16, %s24
        %v253 = vld [vmem:[%s250] sm:$0xf]
        %v254 = vld [vmem:[%s250 + $0x4] sm:$0xf]
        %v255 = vld [vmem:[%s250 + $0x8] sm:$0x1]
        %v256 = vld [vmem:[%s250 + $0xc] sm:$0xf]
        %v257 = vld [vmem:[%s250 + $0x10] sm:$0xf]
        %v258 = vld [vmem:[%s250 + $0x14] sm:$0x1]
        %v259 = vld [vmem:[%s250 + $0x18] sm:$0xf]
        %v260 = vld [vmem:[%s250 + $0x1c] sm:$0xf]
        %v261 = vld [vmem:[%s250 + $0x20] sm:$0x1]
        %v262 = vld [vmem:[%s250 + $0x24] sm:$0xf]
        %v263 = vld [vmem:[%s250 + $0x28] sm:$0xf]
        %v264 = vld [vmem:[%s250 + $0x2c] sm:$0x1]
        %v265 = vld [vmem:[%s250 + $0x30] sm:$0xf]
        %v266 = vld [vmem:[%s250 + $0x34] sm:$0xf]
        %v267 = vld [vmem:[%s250 + $0x38] sm:$0x1]
        %v268 = vld [vmem:[%s250 + $0x3c] sm:$0xf]
        %v269 = vld [vmem:[%s250 + $0x40] sm:$0xf]
        %v270 = vld [vmem:[%s250 + $0x44] sm:$0x1]
        %v271 = vld [vmem:[%s250 + $0x48] sm:$0xf]
        %v272 = vld [vmem:[%s250 + $0x4c] sm:$0xf]
        %v273 = vld [vmem:[%s250 + $0x50] sm:$0x1]
        %v274 = vld [vmem:[%s250 + $0x54] sm:$0xf]
        %v275 = vld [vmem:[%s250 + $0x58] sm:$0xf]
        %v276 = vld [vmem:[%s250 + $0x5c] sm:$0x1]
        %v277 = vld [vmem:[%s250 + $0x60] sm:$0xf]
        %v278 = vld [vmem:[%s250 + $0x64] sm:$0xf]
        %v279 = vld [vmem:[%s250 + $0x68] sm:$0x1]
        %v280 = vld [vmem:[%s250 + $0x6c] sm:$0xf]
        %v281 = vld [vmem:[%s250 + $0x70] sm:$0xf]
        %v282 = vld [vmem:[%s250 + $0x74] sm:$0x1]
        %v283 = vld [vmem:[%s1] sm:$0x3]
        %vm284 = vsmask.f32 3328
        %vm285 = vsmask.f32 7440
        %vm286 = vmor %vm284, %vm285
        %v288 = vshrl.u32 %v253, 16
        %v290 = vrot.slane %v288, 4
        %v291 = vshll.u32 %v253, 16
        %v293 = vrot.slane %v291, 5
        %v294 = vor.u32 %v290, %v293
        %v295 = vrot.slane %v294, 4
        %v297 = vshll.u32 %v254, 16
        %v299 = vrot.slane %v297, 5
        %v300 = vsel %vm286, %v295, %v299
        %v301 = vshrl.u32 %v254, 16
        %v303 = vrot.slane %v301, 4
        %v304 = vor.u32 %v303, %v299
        %v305 = vrot.slane %v304, 4
        %v307 = vshll.u32 %v255, 16
        %v309 = vrot.slane %v307, 5
        %v310 = vsel %vm286, %v305, %v309
        %v312 = vshrl.u32 %v256, 16
        %v314 = vrot.slane %v312, 4
        %v315 = vshll.u32 %v256, 16
        %v317 = vrot.slane %v315, 5
        %v318 = vor.u32 %v314, %v317
        %v319 = vrot.slane %v318, 4
        %v321 = vshll.u32 %v257, 16
        %v323 = vrot.slane %v321, 5
        %v324 = vsel %vm286, %v319, %v323
        %v325 = vshrl.u32 %v257, 16
        %v327 = vrot.slane %v325, 4
        %v328 = vor.u32 %v327, %v323
        %v329 = vrot.slane %v328, 4
        %v331 = vshll.u32 %v258, 16
        %v333 = vrot.slane %v331, 5
        %v334 = vsel %vm286, %v329, %v333
        %v336 = vshrl.u32 %v259, 16
        %v338 = vrot.slane %v336, 4
        %v339 = vshll.u32 %v259, 16
        %v341 = vrot.slane %v339, 5
        %v342 = vor.u32 %v338, %v341
        %v343 = vrot.slane %v342, 4
        %v345 = vshll.u32 %v260, 16
        %v347 = vrot.slane %v345, 5
        %v348 = vsel %vm286, %v343, %v347
        %v349 = vshrl.u32 %v260, 16
        %v351 = vrot.slane %v349, 4
        %v352 = vor.u32 %v351, %v347
        %v353 = vrot.slane %v352, 4
        %v355 = vshll.u32 %v261, 16
        %v357 = vrot.slane %v355, 5
        %v358 = vsel %vm286, %v353, %v357
        %v360 = vshrl.u32 %v262, 16
        %v362 = vrot.slane %v360, 4
        %v363 = vshll.u32 %v262, 16
        %v365 = vrot.slane %v363, 5
        %v366 = vor.u32 %v362, %v365
        %v367 = vrot.slane %v366, 4
        %v369 = vshll.u32 %v263, 16
        %v371 = vrot.slane %v369, 5
        %v372 = vsel %vm286, %v367, %v371
        %v373 = vshrl.u32 %v263, 16
        %v375 = vrot.slane %v373, 4
        %v376 = vor.u32 %v375, %v371
        %v377 = vrot.slane %v376, 4
        %v379 = vshll.u32 %v264, 16
        %v381 = vrot.slane %v379, 5
        %v382 = vsel %vm286, %v377, %v381
        %v384 = vshrl.u32 %v265, 16
        %v386 = vrot.slane %v384, 4
        %v387 = vshll.u32 %v265, 16
        %v389 = vrot.slane %v387, 5
        %v390 = vor.u32 %v386, %v389
        %v391 = vrot.slane %v390, 4
        %v393 = vshll.u32 %v266, 16
        %v395 = vrot.slane %v393, 5
        %v396 = vsel %vm286, %v391, %v395
        %v397 = vshrl.u32 %v266, 16
        %v399 = vrot.slane %v397, 4
        %v400 = vor.u32 %v399, %v395
        %v401 = vrot.slane %v400, 4
        %v403 = vshll.u32 %v267, 16
        %v405 = vrot.slane %v403, 5
        %v406 = vsel %vm286, %v401, %v405
        %v408 = vshrl.u32 %v268, 16
        %v410 = vrot.slane %v408, 4
        %v411 = vshll.u32 %v268, 16
        %v413 = vrot.slane %v411, 5
        %v414 = vor.u32 %v410, %v413
        %v415 = vrot.slane %v414, 4
        %v417 = vshll.u32 %v269, 16
        %v419 = vrot.slane %v417, 5
        %v420 = vsel %vm286, %v415, %v419
        %v421 = vshrl.u32 %v269, 16
        %v423 = vrot.slane %v421, 4
        %v424 = vor.u32 %v423, %v419
        %v425 = vrot.slane %v424, 4
        %v427 = vshll.u32 %v270, 16
        %v429 = vrot.slane %v427, 5
        %v430 = vsel %vm286, %v425, %v429
        %v432 = vshrl.u32 %v271, 16
        %v434 = vrot.slane %v432, 4
        %v435 = vshll.u32 %v271, 16
        %v437 = vrot.slane %v435, 5
        %v438 = vor.u32 %v434, %v437
        %v439 = vrot.slane %v438, 4
        %v441 = vshll.u32 %v272, 16
        %v443 = vrot.slane %v441, 5
        %v444 = vsel %vm286, %v439, %v443
        %v445 = vshrl.u32 %v272, 16
        %v447 = vrot.slane %v445, 4
        %v448 = vor.u32 %v447, %v443
        %v449 = vrot.slane %v448, 4
        %v451 = vshll.u32 %v273, 16
        %v453 = vrot.slane %v451, 5
        %v454 = vsel %vm286, %v449, %v453
        %v456 = vshrl.u32 %v274, 16
        %v458 = vrot.slane %v456, 4
        %v459 = vshll.u32 %v274, 16
        %v461 = vrot.slane %v459, 5
        %v462 = vor.u32 %v458, %v461
        %v463 = vrot.slane %v462, 4
        %v465 = vshll.u32 %v275, 16
        %v467 = vrot.slane %v465, 5
        %v468 = vsel %vm286, %v463, %v467
        %v469 = vshrl.u32 %v275, 16
        %v471 = vrot.slane %v469, 4
        %v472 = vor.u32 %v471, %v467
        %v473 = vrot.slane %v472, 4
        %v475 = vshll.u32 %v276, 16
        %v477 = vrot.slane %v475, 5
        %v478 = vsel %vm286, %v473, %v477
        %v479 = vld [vmem:[%s1] sm:$0xc]
        %v480 = vunpack.c.l.b16 %v300
        %v481 = vunpack.c.l.b16 %v310
        %v482 = vunpack.c.l.b16 %v324
        %v483 = vunpack.c.l.b16 %v334
        %v484 = vunpack.c.l.b16 %v348
        %v485 = vunpack.c.l.b16 %v358
        %v486 = vunpack.c.l.b16 %v372
        %v487 = vunpack.c.l.b16 %v382
        %v488 = vunpack.c.l.b16 %v396
        %v489 = vunpack.c.l.b16 %v406
        %v490 = vunpack.c.l.b16 %v420
        %v491 = vunpack.c.l.b16 %v430
        %v492 = vunpack.c.l.b16 %v444
        %v493 = vunpack.c.l.b16 %v454
        %v494 = vunpack.c.l.b16 %v468
        %v495 = vunpack.c.l.b16 %v478
        %v496 = vpack.c.b16 %v481, %v480
        %v497 = vpack.c.b16 %v483, %v482
        %v498 = vpack.c.b16 %v485, %v484
        %v499 = vpack.c.b16 %v487, %v486
        %v500 = vpack.c.b16 %v489, %v488
        %v501 = vpack.c.b16 %v491, %v490
        %v502 = vpack.c.b16 %v493, %v492
        %v503 = vpack.c.b16 %v495, %v494
        %v505 = vunpack.c.l.b16 %v479
        %v506 = vpack.c.b16 %v505, %v505
        %v507 = vrot.slane %v506, 2
        %vm508 = vcmask 31744
        %v510 = vsel %vm508, %v496, 0
        %v513 = vsel %vm508, %v497, 0
        %v516 = vsel %vm508, %v498, 0
        %v519 = vsel %vm508, %v499, 0
        %v522 = vsel %vm508, %v500, 0
        %v525 = vsel %vm508, %v501, 0
        %v528 = vsel %vm508, %v502, 0
        %v531 = vsel %vm508, %v503, 0
        %vm533 = vcmask 1041408
        %v535 = vsel %vm533, %v507, 0
        %537 = vmatpush.bf16.msra.mxu0 0
        %538 = vmatpush.bf16.msra.mxu0 0
        %539 = vmatpush.bf16.msra.mxu0 0
        %540 = vmatpush.bf16.msra.mxu0 0
        %541 = vmatpush.bf16.msra.mxu0 0
        %542 = vmatpush.bf16.msra.mxu0 0
        %543 = vmatpush.bf16.msra.mxu0 0
        %544 = vmatpush.bf16.msra.mxu0 %v535
        %545 = vmatmul.bf16.gmra.mxu0 %v510
        %v546 = vpop.f32.mrf.mxu0
        %v547 = vadd.f32 0.0, %v546
        %v548 = vpop.f32.mrf.mxu0
        %v549 = vadd.f32 0.0, %v548
        %550 = vmatmul.bf16.gmra.mxu0 %v513
        %v551 = vpop.f32.mrf.mxu0
        %v552 = vadd.f32 0.0, %v551
        %v553 = vpop.f32.mrf.mxu0
        %v554 = vadd.f32 0.0, %v553
        %555 = vmatmul.bf16.gmra.mxu0 %v516
        %v556 = vpop.f32.mrf.mxu0
        %v557 = vadd.f32 0.0, %v556
        %v558 = vpop.f32.mrf.mxu0
        %v559 = vadd.f32 0.0, %v558
        %560 = vmatmul.bf16.gmra.mxu0 %v519
        %v561 = vpop.f32.mrf.mxu0
        %v562 = vadd.f32 0.0, %v561
        %v563 = vpop.f32.mrf.mxu0
        %v564 = vadd.f32 0.0, %v563
        %565 = vmatmul.bf16.gmra.mxu0 %v522
        %v566 = vpop.f32.mrf.mxu0
        %v567 = vadd.f32 0.0, %v566
        %v568 = vpop.f32.mrf.mxu0
        %v569 = vadd.f32 0.0, %v568
        %570 = vmatmul.bf16.gmra.mxu0 %v525
        %v571 = vpop.f32.mrf.mxu0
        %v572 = vadd.f32 0.0, %v571
        %v573 = vpop.f32.mrf.mxu0
        %v574 = vadd.f32 0.0, %v573
        %575 = vmatmul.bf16.gmra.mxu0 %v528
        %v576 = vpop.f32.mrf.mxu0
        %v577 = vadd.f32 0.0, %v576
        %v578 = vpop.f32.mrf.mxu0
        %v579 = vadd.f32 0.0, %v578
        %580 = vmatmul.bf16.gmra.mxu0 %v531
        %v581 = vpop.f32.mrf.mxu0
        %v582 = vadd.f32 0.0, %v581
        %v583 = vpop.f32.mrf.mxu0
        %v584 = vadd.f32 0.0, %v583
        %585 = vdwg.mxu0
        %v602 = vunpack.c.l.b16 %v253
        %v603 = vunpack.c.l.b16 %v254
        %v604 = vunpack.c.l.b16 %v256
        %v605 = vunpack.c.l.b16 %v257
        %v606 = vunpack.c.l.b16 %v259
        %v607 = vunpack.c.l.b16 %v260
        %v608 = vunpack.c.l.b16 %v262
        %v609 = vunpack.c.l.b16 %v263
        %v610 = vunpack.c.l.b16 %v265
        %v611 = vunpack.c.l.b16 %v266
        %v612 = vunpack.c.l.b16 %v268
        %v613 = vunpack.c.l.b16 %v269
        %v614 = vunpack.c.l.b16 %v271
        %v615 = vunpack.c.l.b16 %v272
        %v616 = vunpack.c.l.b16 %v274
        %v617 = vunpack.c.l.b16 %v275
        %v618 = vpack.c.b16 %v603, %v602
        %v619 = vpack.c.b16 %v605, %v604
        %v620 = vpack.c.b16 %v607, %v606
        %v621 = vpack.c.b16 %v609, %v608
        %v622 = vpack.c.b16 %v611, %v610
        %v623 = vpack.c.b16 %v613, %v612
        %v624 = vpack.c.b16 %v615, %v614
        %v625 = vpack.c.b16 %v617, %v616
        %v627 = vsel %vm508, %v618, 0
        %v630 = vsel %vm508, %v619, 0
        %v633 = vsel %vm508, %v620, 0
        %v636 = vsel %vm508, %v621, 0
        %v639 = vsel %vm508, %v622, 0
        %v642 = vsel %vm508, %v623, 0
        %v645 = vsel %vm508, %v624, 0
        %v648 = vsel %vm508, %v625, 0
        %v651 = vsel %vm533, %v283, 0
        %653 = vmatpush.bf16.msra.mxu0 0
        %654 = vmatpush.bf16.msra.mxu0 0
        %655 = vmatpush.bf16.msra.mxu0 0
        %656 = vmatpush.bf16.msra.mxu0 0
        %657 = vmatpush.bf16.msra.mxu0 0
        %658 = vmatpush.bf16.msra.mxu0 0
        %659 = vmatpush.bf16.msra.mxu0 0
        %660 = vmatpush.bf16.msra.mxu0 %v651
        %661 = vmatmul.bf16.gmra.mxu0 %v627
        %v662 = vpop.f32.mrf.mxu0
        %v663 = vadd.f32 %v547, %v662
        %v664 = vpop.f32.mrf.mxu0
        %v665 = vadd.f32 %v549, %v664
        %666 = vmatmul.bf16.gmra.mxu0 %v630
        %v667 = vpop.f32.mrf.mxu0
        %v668 = vadd.f32 %v552, %v667
        %v669 = vpop.f32.mrf.mxu0
        %v670 = vadd.f32 %v554, %v669
        %671 = vmatmul.bf16.gmra.mxu0 %v633
        %v672 = vpop.f32.mrf.mxu0
        %v673 = vadd.f32 %v557, %v672
        %v674 = vpop.f32.mrf.mxu0
        %v675 = vadd.f32 %v559, %v674
        %676 = vmatmul.bf16.gmra.mxu0 %v636
        %v677 = vpop.f32.mrf.mxu0
        %v678 = vadd.f32 %v562, %v677
        %v679 = vpop.f32.mrf.mxu0
        %v680 = vadd.f32 %v564, %v679
        %681 = vmatmul.bf16.gmra.mxu0 %v639
        %v682 = vpop.f32.mrf.mxu0
        %v683 = vadd.f32 %v567, %v682
        %v684 = vpop.f32.mrf.mxu0
        %v685 = vadd.f32 %v569, %v684
        %686 = vmatmul.bf16.gmra.mxu0 %v642
        %v687 = vpop.f32.mrf.mxu0
        %v688 = vadd.f32 %v572, %v687
        %v689 = vpop.f32.mrf.mxu0
        %v690 = vadd.f32 %v574, %v689
        %691 = vmatmul.bf16.gmra.mxu0 %v645
        %v692 = vpop.f32.mrf.mxu0
        %v693 = vadd.f32 %v577, %v692
        %v694 = vpop.f32.mrf.mxu0
        %v695 = vadd.f32 %v579, %v694
        %696 = vmatmul.bf16.gmra.mxu0 %v648
        %v697 = vpop.f32.mrf.mxu0
        %v698 = vadd.f32 %v582, %v697
        %v699 = vpop.f32.mrf.mxu0
        %v700 = vadd.f32 %v584, %v699
        %701 = vdwg.mxu0
        %vm710 = vcmask 1042432
        %vm711 = vcmask 1046532
        %vm712 = vmor %vm710, %vm711
        %v713 = vrot.slane %v253, 5
        %v714 = vrot.slane %v713, 4
        %v715 = vrot.slane %v254, 5
        %v716 = vsel %vm712, %v714, %v715
        %v717 = vrot.slane %v715, 4
        %v718 = vrot.slane %v255, 5
        %v719 = vsel %vm712, %v717, %v718
        %v720 = vrot.slane %v256, 5
        %v721 = vrot.slane %v720, 4
        %v722 = vrot.slane %v257, 5
        %v723 = vsel %vm712, %v721, %v722
        %v724 = vrot.slane %v722, 4
        %v725 = vrot.slane %v258, 5
        %v726 = vsel %vm712, %v724, %v725
        %v727 = vrot.slane %v259, 5
        %v728 = vrot.slane %v727, 4
        %v729 = vrot.slane %v260, 5
        %v730 = vsel %vm712, %v728, %v729
        %v731 = vrot.slane %v729, 4
        %v732 = vrot.slane %v261, 5
        %v733 = vsel %vm712, %v731, %v732
        %v734 = vrot.slane %v262, 5
        %v735 = vrot.slane %v734, 4
        %v736 = vrot.slane %v263, 5
        %v737 = vsel %vm712, %v735, %v736
        %v738 = vrot.slane %v736, 4
        %v739 = vrot.slane %v264, 5
        %v740 = vsel %vm712, %v738, %v739
        %v741 = vrot.slane %v265, 5
        %v742 = vrot.slane %v741, 4
        %v743 = vrot.slane %v266, 5
        %v744 = vsel %vm712, %v742, %v743
        %v745 = vrot.slane %v743, 4
        %v746 = vrot.slane %v267, 5
        %v747 = vsel %vm712, %v745, %v746
        %v748 = vrot.slane %v268, 5
        %v749 = vrot.slane %v748, 4
        %v750 = vrot.slane %v269, 5
        %v751 = vsel %vm712, %v749, %v750
        %v752 = vrot.slane %v750, 4
        %v753 = vrot.slane %v270, 5
        %v754 = vsel %vm712, %v752, %v753
        %v755 = vrot.slane %v271, 5
        %v756 = vrot.slane %v755, 4
        %v757 = vrot.slane %v272, 5
        %v758 = vsel %vm712, %v756, %v757
        %v759 = vrot.slane %v757, 4
        %v760 = vrot.slane %v273, 5
        %v761 = vsel %vm712, %v759, %v760
        %v762 = vrot.slane %v274, 5
        %v763 = vrot.slane %v762, 4
        %v764 = vrot.slane %v275, 5
        %v765 = vsel %vm712, %v763, %v764
        %v766 = vrot.slane %v764, 4
        %v767 = vrot.slane %v276, 5
        %v768 = vsel %vm712, %v766, %v767
        %v769 = vld [vmem:[%s1 + $0x4] sm:$0x3]
        %v770 = vunpack.c.l.b16 %v716
        %v771 = vunpack.c.l.b16 %v719
        %v772 = vunpack.c.l.b16 %v723
        %v773 = vunpack.c.l.b16 %v726
        %v774 = vunpack.c.l.b16 %v730
        %v775 = vunpack.c.l.b16 %v733
        %v776 = vunpack.c.l.b16 %v737
        %v777 = vunpack.c.l.b16 %v740
        %v778 = vunpack.c.l.b16 %v744
        %v779 = vunpack.c.l.b16 %v747
        %v780 = vunpack.c.l.b16 %v751
        %v781 = vunpack.c.l.b16 %v754
        %v782 = vunpack.c.l.b16 %v758
        %v783 = vunpack.c.l.b16 %v761
        %v784 = vunpack.c.l.b16 %v765
        %v785 = vunpack.c.l.b16 %v768
        %v786 = vpack.c.b16 %v771, %v770
        %v787 = vpack.c.b16 %v773, %v772
        %v788 = vpack.c.b16 %v775, %v774
        %v789 = vpack.c.b16 %v777, %v776
        %v790 = vpack.c.b16 %v779, %v778
        %v791 = vpack.c.b16 %v781, %v780
        %v792 = vpack.c.b16 %v783, %v782
        %v793 = vpack.c.b16 %v785, %v784
        %v795 = vsel %vm508, %v786, 0
        %v798 = vsel %vm508, %v787, 0
        %v801 = vsel %vm508, %v788, 0
        %v804 = vsel %vm508, %v789, 0
        %v807 = vsel %vm508, %v790, 0
        %v810 = vsel %vm508, %v791, 0
        %v813 = vsel %vm508, %v792, 0
        %v816 = vsel %vm508, %v793, 0
        %v819 = vsel %vm533, %v769, 0
        %821 = vmatpush.bf16.msra.mxu0 0
        %822 = vmatpush.bf16.msra.mxu0 0
        %823 = vmatpush.bf16.msra.mxu0 0
        %824 = vmatpush.bf16.msra.mxu0 0
        %825 = vmatpush.bf16.msra.mxu0 0
        %826 = vmatpush.bf16.msra.mxu0 0
        %827 = vmatpush.bf16.msra.mxu0 0
        %828 = vmatpush.bf16.msra.mxu0 %v819
        %829 = vmatmul.bf16.gmra.mxu0 %v795
        %v830 = vpop.f32.mrf.mxu0
        %v831 = vadd.f32 0.0, %v830
        %v832 = vpop.f32.mrf.mxu0
        %v833 = vadd.f32 0.0, %v832
        %834 = vmatmul.bf16.gmra.mxu0 %v798
        %v835 = vpop.f32.mrf.mxu0
        %v836 = vadd.f32 0.0, %v835
        %v837 = vpop.f32.mrf.mxu0
        %v838 = vadd.f32 0.0, %v837
        %839 = vmatmul.bf16.gmra.mxu0 %v801
        %v840 = vpop.f32.mrf.mxu0
        %v841 = vadd.f32 0.0, %v840
        %v842 = vpop.f32.mrf.mxu0
        %v843 = vadd.f32 0.0, %v842
        %844 = vmatmul.bf16.gmra.mxu0 %v804
        %v845 = vpop.f32.mrf.mxu0
        %v846 = vadd.f32 0.0, %v845
        %v847 = vpop.f32.mrf.mxu0
        %v848 = vadd.f32 0.0, %v847
        %849 = vmatmul.bf16.gmra.mxu0 %v807
        %v850 = vpop.f32.mrf.mxu0
        %v851 = vadd.f32 0.0, %v850
        %v852 = vpop.f32.mrf.mxu0
        %v853 = vadd.f32 0.0, %v852
        %854 = vmatmul.bf16.gmra.mxu0 %v810
        %v855 = vpop.f32.mrf.mxu0
        %v856 = vadd.f32 0.0, %v855
        %v857 = vpop.f32.mrf.mxu0
        %v858 = vadd.f32 0.0, %v857
        %859 = vmatmul.bf16.gmra.mxu0 %v813
        %v860 = vpop.f32.mrf.mxu0
        %v861 = vadd.f32 0.0, %v860
        %v862 = vpop.f32.mrf.mxu0
        %v863 = vadd.f32 0.0, %v862
        %864 = vmatmul.bf16.gmra.mxu0 %v816
        %v865 = vpop.f32.mrf.mxu0
        %v866 = vadd.f32 0.0, %v865
        %v867 = vpop.f32.mrf.mxu0
        %v868 = vadd.f32 0.0, %v867
        %869 = vdwg.mxu0
        %v870 = vadd.f32 %v663, %v831
        %v871 = vadd.f32 %v665, %v833
        %v872 = vadd.f32 %v668, %v836
        %v873 = vadd.f32 %v670, %v838
        %v874 = vadd.f32 %v673, %v841
        %v875 = vadd.f32 %v675, %v843
        %v876 = vadd.f32 %v678, %v846
        %v877 = vadd.f32 %v680, %v848
        %v878 = vadd.f32 %v683, %v851
        %v879 = vadd.f32 %v685, %v853
        %v880 = vadd.f32 %v688, %v856
        %v881 = vadd.f32 %v690, %v858
        %v882 = vadd.f32 %v693, %v861
        %v883 = vadd.f32 %v695, %v863
        %v884 = vadd.f32 %v698, %v866
        %v885 = vadd.f32 %v700, %v868
        %v886 = vld [vmem:[%s1 + $0x4] sm:$0xc]
        %v889 = vunpack.c.l.b16 %v277
        %v890 = vunpack.c.l.b16 %v278
        %v891 = vpack.c.b16 %v890, %v889
        %v893 = vunpack.c.l.b16 %v886
        %v894 = vpack.c.b16 %v893, %v893
        %v895 = vrot.slane %v894, 2
        %v897 = vsel %vm508, %v891, 0
        %v900 = vsel %vm533, %v895, 0
        %902 = vmatpush.bf16.msra.mxu0 0
        %903 = vmatpush.bf16.msra.mxu0 0
        %904 = vmatpush.bf16.msra.mxu0 0
        %905 = vmatpush.bf16.msra.mxu0 0
        %906 = vmatpush.bf16.msra.mxu0 0
        %907 = vmatpush.bf16.msra.mxu0 0
        %908 = vmatpush.bf16.msra.mxu0 0
        %909 = vmatpush.bf16.msra.mxu0 %v900
        %910 = vmatmul.bf16.gmra.mxu0 %v630
        %v911 = vpop.f32.mrf.mxu0
        %v912 = vadd.f32 0.0, %v911
        %v913 = vpop.f32.mrf.mxu0
        %v914 = vadd.f32 0.0, %v913
        %915 = vmatmul.bf16.gmra.mxu0 %v633
        %v916 = vpop.f32.mrf.mxu0
        %v917 = vadd.f32 0.0, %v916
        %v918 = vpop.f32.mrf.mxu0
        %v919 = vadd.f32 0.0, %v918
        %920 = vmatmul.bf16.gmra.mxu0 %v636
        %v921 = vpop.f32.mrf.mxu0
        %v922 = vadd.f32 0.0, %v921
        %v923 = vpop.f32.mrf.mxu0
        %v924 = vadd.f32 0.0, %v923
        %925 = vmatmul.bf16.gmra.mxu0 %v639
        %v926 = vpop.f32.mrf.mxu0
        %v927 = vadd.f32 0.0, %v926
        %v928 = vpop.f32.mrf.mxu0
        %v929 = vadd.f32 0.0, %v928
        %930 = vmatmul.bf16.gmra.mxu0 %v642
        %v931 = vpop.f32.mrf.mxu0
        %v932 = vadd.f32 0.0, %v931
        %v933 = vpop.f32.mrf.mxu0
        %v934 = vadd.f32 0.0, %v933
        %935 = vmatmul.bf16.gmra.mxu0 %v645
        %v936 = vpop.f32.mrf.mxu0
        %v937 = vadd.f32 0.0, %v936
        %v938 = vpop.f32.mrf.mxu0
        %v939 = vadd.f32 0.0, %v938
        %940 = vmatmul.bf16.gmra.mxu0 %v648
        %v941 = vpop.f32.mrf.mxu0
        %v942 = vadd.f32 0.0, %v941
        %v943 = vpop.f32.mrf.mxu0
        %v944 = vadd.f32 0.0, %v943
        %945 = vmatmul.bf16.gmra.mxu0 %v897
        %v946 = vpop.f32.mrf.mxu0
        %v947 = vadd.f32 0.0, %v946
        %v948 = vpop.f32.mrf.mxu0
        %v949 = vadd.f32 0.0, %v948
        %950 = vdwg.mxu0
        %v951 = vadd.f32 %v870, %v912
        %v952 = vadd.f32 %v871, %v914
        %v953 = vadd.f32 %v872, %v917
        %v954 = vadd.f32 %v873, %v919
        %v955 = vadd.f32 %v874, %v922
        %v956 = vadd.f32 %v875, %v924
        %v957 = vadd.f32 %v876, %v927
        %v958 = vadd.f32 %v877, %v929
        %v959 = vadd.f32 %v878, %v932
        %v960 = vadd.f32 %v879, %v934
        %v961 = vadd.f32 %v880, %v937
        %v962 = vadd.f32 %v881, %v939
        %v963 = vadd.f32 %v882, %v942
        %v964 = vadd.f32 %v883, %v944
        %v965 = vadd.f32 %v884, %v947
        %v966 = vadd.f32 %v885, %v949
        %v968 = vshrl.u32 %v277, 16
        %v970 = vrot.slane %v968, 4
        %v971 = vshll.u32 %v277, 16
        %v973 = vrot.slane %v971, 5
        %v974 = vor.u32 %v970, %v973
        %v975 = vrot.slane %v974, 4
        %v977 = vshll.u32 %v278, 16
        %v979 = vrot.slane %v977, 5
        %v980 = vsel %vm286, %v975, %v979
        %v981 = vshrl.u32 %v278, 16
        %v983 = vrot.slane %v981, 4
        %v984 = vor.u32 %v983, %v979
        %v985 = vrot.slane %v984, 4
        %v987 = vshll.u32 %v279, 16
        %v989 = vrot.slane %v987, 5
        %v990 = vsel %vm286, %v985, %v989
        %v991 = vld [vmem:[%s1 + $0x8] sm:$0x3]
        %v992 = vunpack.c.l.b16 %v980
        %v993 = vunpack.c.l.b16 %v990
        %v994 = vpack.c.b16 %v993, %v992
        %v996 = vsel %vm508, %v994, 0
        %v999 = vsel %vm533, %v991, 0
        %1001 = vmatpush.bf16.msra.mxu0 0
        %1002 = vmatpush.bf16.msra.mxu0 0
        %1003 = vmatpush.bf16.msra.mxu0 0
        %1004 = vmatpush.bf16.msra.mxu0 0
        %1005 = vmatpush.bf16.msra.mxu0 0
        %1006 = vmatpush.bf16.msra.mxu0 0
        %1007 = vmatpush.bf16.msra.mxu0 0
        %1008 = vmatpush.bf16.msra.mxu0 %v999
        %1009 = vmatmul.bf16.gmra.mxu0 %v513
        %v1010 = vpop.f32.mrf.mxu0
        %v1011 = vadd.f32 0.0, %v1010
        %v1012 = vpop.f32.mrf.mxu0
        %v1013 = vadd.f32 0.0, %v1012
        %1014 = vmatmul.bf16.gmra.mxu0 %v516
        %v1015 = vpop.f32.mrf.mxu0
        %v1016 = vadd.f32 0.0, %v1015
        %v1017 = vpop.f32.mrf.mxu0
        %v1018 = vadd.f32 0.0, %v1017
        %1019 = vmatmul.bf16.gmra.mxu0 %v519
        %v1020 = vpop.f32.mrf.mxu0
        %v1021 = vadd.f32 0.0, %v1020
        %v1022 = vpop.f32.mrf.mxu0
        %v1023 = vadd.f32 0.0, %v1022
        %1024 = vmatmul.bf16.gmra.mxu0 %v522
        %v1025 = vpop.f32.mrf.mxu0
        %v1026 = vadd.f32 0.0, %v1025
        %v1027 = vpop.f32.mrf.mxu0
        %v1028 = vadd.f32 0.0, %v1027
        %1029 = vmatmul.bf16.gmra.mxu0 %v525
        %v1030 = vpop.f32.mrf.mxu0
        %v1031 = vadd.f32 0.0, %v1030
        %v1032 = vpop.f32.mrf.mxu0
        %v1033 = vadd.f32 0.0, %v1032
        %1034 = vmatmul.bf16.gmra.mxu0 %v528
        %v1035 = vpop.f32.mrf.mxu0
        %v1036 = vadd.f32 0.0, %v1035
        %v1037 = vpop.f32.mrf.mxu0
        %v1038 = vadd.f32 0.0, %v1037
        %1039 = vmatmul.bf16.gmra.mxu0 %v531
        %v1040 = vpop.f32.mrf.mxu0
        %v1041 = vadd.f32 0.0, %v1040
        %v1042 = vpop.f32.mrf.mxu0
        %v1043 = vadd.f32 0.0, %v1042
        %1044 = vmatmul.bf16.gmra.mxu0 %v996
        %v1045 = vpop.f32.mrf.mxu0
        %v1046 = vadd.f32 0.0, %v1045
        %v1047 = vpop.f32.mrf.mxu0
        %v1048 = vadd.f32 0.0, %v1047
        %1049 = vdwg.mxu0
        %v1050 = vadd.f32 %v951, %v1011
        %v1051 = vadd.f32 %v952, %v1013
        %v1052 = vadd.f32 %v953, %v1016
        %v1053 = vadd.f32 %v954, %v1018
        %v1054 = vadd.f32 %v955, %v1021
        %v1055 = vadd.f32 %v956, %v1023
        %v1056 = vadd.f32 %v957, %v1026
        %v1057 = vadd.f32 %v958, %v1028
        %v1058 = vadd.f32 %v959, %v1031
        %v1059 = vadd.f32 %v960, %v1033
        %v1060 = vadd.f32 %v961, %v1036
        %v1061 = vadd.f32 %v962, %v1038
        %v1062 = vadd.f32 %v963, %v1041
        %v1063 = vadd.f32 %v964, %v1043
        %v1064 = vadd.f32 %v965, %v1046
        %v1065 = vadd.f32 %v966, %v1048
        %v1067 = vrot.slane %v277, 5
        %v1068 = vrot.slane %v1067, 4
        %v1069 = vrot.slane %v278, 5
        %v1070 = vsel %vm712, %v1068, %v1069
        %v1071 = vrot.slane %v1069, 4
        %v1072 = vrot.slane %v279, 5
        %v1073 = vsel %vm712, %v1071, %v1072
        %v1074 = vld [vmem:[%s1 + $0x8] sm:$0xc]
        %v1075 = vunpack.c.l.b16 %v1070
        %v1076 = vunpack.c.l.b16 %v1073
        %v1077 = vpack.c.b16 %v1076, %v1075
        %v1079 = vunpack.c.l.b16 %v1074
        %v1080 = vpack.c.b16 %v1079, %v1079
        %v1081 = vrot.slane %v1080, 2
        %v1083 = vsel %vm508, %v1077, 0
        %v1086 = vsel %vm533, %v1081, 0
        %1088 = vmatpush.bf16.msra.mxu0 0
        %1089 = vmatpush.bf16.msra.mxu0 0
        %1090 = vmatpush.bf16.msra.mxu0 0
        %1091 = vmatpush.bf16.msra.mxu0 0
        %1092 = vmatpush.bf16.msra.mxu0 0
        %1093 = vmatpush.bf16.msra.mxu0 0
        %1094 = vmatpush.bf16.msra.mxu0 0
        %1095 = vmatpush.bf16.msra.mxu0 %v1086
        %1096 = vmatmul.bf16.gmra.mxu0 %v798
        %v1097 = vpop.f32.mrf.mxu0
        %v1098 = vadd.f32 0.0, %v1097
        %v1099 = vpop.f32.mrf.mxu0
        %v1100 = vadd.f32 0.0, %v1099
        %1101 = vmatmul.bf16.gmra.mxu0 %v801
        %v1102 = vpop.f32.mrf.mxu0
        %v1103 = vadd.f32 0.0, %v1102
        %v1104 = vpop.f32.mrf.mxu0
        %v1105 = vadd.f32 0.0, %v1104
        %1106 = vmatmul.bf16.gmra.mxu0 %v804
        %v1107 = vpop.f32.mrf.mxu0
        %v1108 = vadd.f32 0.0, %v1107
        %v1109 = vpop.f32.mrf.mxu0
        %v1110 = vadd.f32 0.0, %v1109
        %1111 = vmatmul.bf16.gmra.mxu0 %v807
        %v1112 = vpop.f32.mrf.mxu0
        %v1113 = vadd.f32 0.0, %v1112
        %v1114 = vpop.f32.mrf.mxu0
        %v1115 = vadd.f32 0.0, %v1114
        %1116 = vmatmul.bf16.gmra.mxu0 %v810
        %v1117 = vpop.f32.mrf.mxu0
        %v1118 = vadd.f32 0.0, %v1117
        %v1119 = vpop.f32.mrf.mxu0
        %v1120 = vadd.f32 0.0, %v1119
        %1121 = vmatmul.bf16.gmra.mxu0 %v813
        %v1122 = vpop.f32.mrf.mxu0
        %v1123 = vadd.f32 0.0, %v1122
        %v1124 = vpop.f32.mrf.mxu0
        %v1125 = vadd.f32 0.0, %v1124
        %1126 = vmatmul.bf16.gmra.mxu0 %v816
        %v1127 = vpop.f32.mrf.mxu0
        %v1128 = vadd.f32 0.0, %v1127
        %v1129 = vpop.f32.mrf.mxu0
        %v1130 = vadd.f32 0.0, %v1129
        %1131 = vmatmul.bf16.gmra.mxu0 %v1083
        %v1132 = vpop.f32.mrf.mxu0
        %v1133 = vadd.f32 0.0, %v1132
        %v1134 = vpop.f32.mrf.mxu0
        %v1135 = vadd.f32 0.0, %v1134
        %1136 = vdwg.mxu0
        %v1137 = vadd.f32 %v1050, %v1098
        %v1138 = vadd.f32 %v1051, %v1100
        %v1139 = vadd.f32 %v1052, %v1103
        %v1140 = vadd.f32 %v1053, %v1105
        %v1141 = vadd.f32 %v1054, %v1108
        %v1142 = vadd.f32 %v1055, %v1110
        %v1143 = vadd.f32 %v1056, %v1113
        %v1144 = vadd.f32 %v1057, %v1115
        %v1145 = vadd.f32 %v1058, %v1118
        %v1146 = vadd.f32 %v1059, %v1120
        %v1147 = vadd.f32 %v1060, %v1123
        %v1148 = vadd.f32 %v1061, %v1125
        %v1149 = vadd.f32 %v1062, %v1128
        %v1150 = vadd.f32 %v1063, %v1130
        %v1151 = vadd.f32 %v1064, %v1133
        %v1152 = vadd.f32 %v1065, %v1135
        %v1153 = vld [vmem:[%s1 + $0xc] sm:$0x3]
        %v1156 = vunpack.c.l.b16 %v280
        %v1157 = vunpack.c.l.b16 %v281
        %v1158 = vpack.c.b16 %v1157, %v1156
        %v1160 = vsel %vm508, %v1158, 0
        %v1163 = vsel %vm533, %v1153, 0
        %1165 = vmatpush.bf16.msra.mxu0 0
        %1166 = vmatpush.bf16.msra.mxu0 0
        %1167 = vmatpush.bf16.msra.mxu0 0
        %1168 = vmatpush.bf16.msra.mxu0 0
        %1169 = vmatpush.bf16.msra.mxu0 0
        %1170 = vmatpush.bf16.msra.mxu0 0
        %1171 = vmatpush.bf16.msra.mxu0 0
        %1172 = vmatpush.bf16.msra.mxu0 %v1163
        %1173 = vmatmul.bf16.gmra.mxu0 %v633
        %v1174 = vpop.f32.mrf.mxu0
        %v1175 = vadd.f32 0.0, %v1174
        %v1176 = vpop.f32.mrf.mxu0
        %v1177 = vadd.f32 0.0, %v1176
        %1178 = vmatmul.bf16.gmra.mxu0 %v636
        %v1179 = vpop.f32.mrf.mxu0
        %v1180 = vadd.f32 0.0, %v1179
        %v1181 = vpop.f32.mrf.mxu0
        %v1182 = vadd.f32 0.0, %v1181
        %1183 = vmatmul.bf16.gmra.mxu0 %v639
        %v1184 = vpop.f32.mrf.mxu0
        %v1185 = vadd.f32 0.0, %v1184
        %v1186 = vpop.f32.mrf.mxu0
        %v1187 = vadd.f32 0.0, %v1186
        %1188 = vmatmul.bf16.gmra.mxu0 %v642
        %v1189 = vpop.f32.mrf.mxu0
        %v1190 = vadd.f32 0.0, %v1189
        %v1191 = vpop.f32.mrf.mxu0
        %v1192 = vadd.f32 0.0, %v1191
        %1193 = vmatmul.bf16.gmra.mxu0 %v645
        %v1194 = vpop.f32.mrf.mxu0
        %v1195 = vadd.f32 0.0, %v1194
        %v1196 = vpop.f32.mrf.mxu0
        %v1197 = vadd.f32 0.0, %v1196
        %1198 = vmatmul.bf16.gmra.mxu0 %v648
        %v1199 = vpop.f32.mrf.mxu0
        %v1200 = vadd.f32 0.0, %v1199
        %v1201 = vpop.f32.mrf.mxu0
        %v1202 = vadd.f32 0.0, %v1201
        %1203 = vmatmul.bf16.gmra.mxu0 %v897
        %v1204 = vpop.f32.mrf.mxu0
        %v1205 = vadd.f32 0.0, %v1204
        %v1206 = vpop.f32.mrf.mxu0
        %v1207 = vadd.f32 0.0, %v1206
        %1208 = vmatmul.bf16.gmra.mxu0 %v1160
        %v1209 = vpop.f32.mrf.mxu0
        %v1210 = vadd.f32 0.0, %v1209
        %v1211 = vpop.f32.mrf.mxu0
        %v1212 = vadd.f32 0.0, %v1211
        %1213 = vdwg.mxu0
        %v1214 = vadd.f32 %v1137, %v1175
        %v1215 = vadd.f32 %v1138, %v1177
        %v1216 = vadd.f32 %v1139, %v1180
        %v1217 = vadd.f32 %v1140, %v1182
        %v1218 = vadd.f32 %v1141, %v1185
        %v1219 = vadd.f32 %v1142, %v1187
        %v1220 = vadd.f32 %v1143, %v1190
        %v1221 = vadd.f32 %v1144, %v1192
        %v1222 = vadd.f32 %v1145, %v1195
        %v1223 = vadd.f32 %v1146, %v1197
        %v1224 = vadd.f32 %v1147, %v1200
        %v1225 = vadd.f32 %v1148, %v1202
        %v1226 = vadd.f32 %v1149, %v1205
        %v1227 = vadd.f32 %v1150, %v1207
        %v1228 = vadd.f32 %v1151, %v1210
        %v1229 = vadd.f32 %v1152, %v1212
        %v1231 = vshrl.u32 %v280, 16
        %v1233 = vrot.slane %v1231, 4
        %v1234 = vshll.u32 %v280, 16
        %v1236 = vrot.slane %v1234, 5
        %v1237 = vor.u32 %v1233, %v1236
        %v1238 = vrot.slane %v1237, 4
        %v1240 = vshll.u32 %v281, 16
        %v1242 = vrot.slane %v1240, 5
        %v1243 = vsel %vm286, %v1238, %v1242
        %v1244 = vshrl.u32 %v281, 16
        %v1246 = vrot.slane %v1244, 4
        %v1247 = vor.u32 %v1246, %v1242
        %v1248 = vrot.slane %v1247, 4
        %v1250 = vshll.u32 %v282, 16
        %v1252 = vrot.slane %v1250, 5
        %v1253 = vsel %vm286, %v1248, %v1252
        %v1254 = vld [vmem:[%s1 + $0xc] sm:$0xc]
        %v1255 = vunpack.c.l.b16 %v1243
        %v1256 = vunpack.c.l.b16 %v1253
        %v1257 = vpack.c.b16 %v1256, %v1255
        %v1259 = vunpack.c.l.b16 %v1254
        %v1260 = vpack.c.b16 %v1259, %v1259
        %v1261 = vrot.slane %v1260, 2
        %v1263 = vsel %vm508, %v1257, 0
        %v1266 = vsel %vm533, %v1261, 0
        %1268 = vmatpush.bf16.msra.mxu0 0
        %1269 = vmatpush.bf16.msra.mxu0 0
        %1270 = vmatpush.bf16.msra.mxu0 0
        %1271 = vmatpush.bf16.msra.mxu0 0
        %1272 = vmatpush.bf16.msra.mxu0 0
        %1273 = vmatpush.bf16.msra.mxu0 0
        %1274 = vmatpush.bf16.msra.mxu0 0
        %1275 = vmatpush.bf16.msra.mxu0 %v1266
        %1276 = vmatmul.bf16.gmra.mxu0 %v516
        %v1277 = vpop.f32.mrf.mxu0
        %v1278 = vadd.f32 0.0, %v1277
        %v1279 = vpop.f32.mrf.mxu0
        %v1280 = vadd.f32 0.0, %v1279
        %1281 = vmatmul.bf16.gmra.mxu0 %v519
        %v1282 = vpop.f32.mrf.mxu0
        %v1283 = vadd.f32 0.0, %v1282
        %v1284 = vpop.f32.mrf.mxu0
        %v1285 = vadd.f32 0.0, %v1284
        %1286 = vmatmul.bf16.gmra.mxu0 %v522
        %v1287 = vpop.f32.mrf.mxu0
        %v1288 = vadd.f32 0.0, %v1287
        %v1289 = vpop.f32.mrf.mxu0
        %v1290 = vadd.f32 0.0, %v1289
        %1291 = vmatmul.bf16.gmra.mxu0 %v525
        %v1292 = vpop.f32.mrf.mxu0
        %v1293 = vadd.f32 0.0, %v1292
        %v1294 = vpop.f32.mrf.mxu0
        %v1295 = vadd.f32 0.0, %v1294
        %1296 = vmatmul.bf16.gmra.mxu0 %v528
        %v1297 = vpop.f32.mrf.mxu0
        %v1298 = vadd.f32 0.0, %v1297
        %v1299 = vpop.f32.mrf.mxu0
        %v1300 = vadd.f32 0.0, %v1299
        %1301 = vmatmul.bf16.gmra.mxu0 %v531
        %v1302 = vpop.f32.mrf.mxu0
        %v1303 = vadd.f32 0.0, %v1302
        %v1304 = vpop.f32.mrf.mxu0
        %v1305 = vadd.f32 0.0, %v1304
        %1306 = vmatmul.bf16.gmra.mxu0 %v996
        %v1307 = vpop.f32.mrf.mxu0
        %v1308 = vadd.f32 0.0, %v1307
        %v1309 = vpop.f32.mrf.mxu0
        %v1310 = vadd.f32 0.0, %v1309
        %1311 = vmatmul.bf16.gmra.mxu0 %v1263
        %v1312 = vpop.f32.mrf.mxu0
        %v1313 = vadd.f32 0.0, %v1312
        %v1314 = vpop.f32.mrf.mxu0
        %v1315 = vadd.f32 0.0, %v1314
        %1316 = vdwg.mxu0
        %v1317 = vadd.f32 %v1214, %v1278
        %v1318 = vadd.f32 %v1215, %v1280
        %v1319 = vadd.f32 %v1216, %v1283
        %v1320 = vadd.f32 %v1217, %v1285
        %v1321 = vadd.f32 %v1218, %v1288
        %v1322 = vadd.f32 %v1219, %v1290
        %v1323 = vadd.f32 %v1220, %v1293
        %v1324 = vadd.f32 %v1221, %v1295
        %v1325 = vadd.f32 %v1222, %v1298
        %v1326 = vadd.f32 %v1223, %v1300
        %v1327 = vadd.f32 %v1224, %v1303
        %v1328 = vadd.f32 %v1225, %v1305
        %v1329 = vadd.f32 %v1226, %v1308
        %v1330 = vadd.f32 %v1227, %v1310
        %v1331 = vadd.f32 %v1228, %v1313
        %v1332 = vadd.f32 %v1229, %v1315
        %v1334 = vrot.slane %v280, 5
        %v1335 = vrot.slane %v1334, 4
        %v1336 = vrot.slane %v281, 5
        %v1337 = vsel %vm712, %v1335, %v1336
        %v1338 = vrot.slane %v1336, 4
        %v1339 = vrot.slane %v282, 5
        %v1340 = vsel %vm712, %v1338, %v1339
        %v1341 = vld [vmem:[%s1 + $0x10] sm:$0x3]
        %v1342 = vunpack.c.l.b16 %v1337
        %v1343 = vunpack.c.l.b16 %v1340
        %v1344 = vpack.c.b16 %v1343, %v1342
        %v1346 = vsel %vm508, %v1344, 0
        %v1349 = vsel %vm533, %v1341, 0
        %1351 = vmatpush.bf16.msra.mxu0 0
        %1352 = vmatpush.bf16.msra.mxu0 0
        %1353 = vmatpush.bf16.msra.mxu0 0
        %1354 = vmatpush.bf16.msra.mxu0 0
        %1355 = vmatpush.bf16.msra.mxu0 0
        %1356 = vmatpush.bf16.msra.mxu0 0
        %1357 = vmatpush.bf16.msra.mxu0 0
        %1358 = vmatpush.bf16.msra.mxu0 %v1349
        %1359 = vmatmul.bf16.gmra.mxu0 %v801
        %v1360 = vpop.f32.mrf.mxu0
        %v1361 = vadd.f32 0.0, %v1360
        %v1362 = vpop.f32.mrf.mxu0
        %v1363 = vadd.f32 0.0, %v1362
        %1364 = vmatmul.bf16.gmra.mxu0 %v804
        %v1365 = vpop.f32.mrf.mxu0
        %v1366 = vadd.f32 0.0, %v1365
        %v1367 = vpop.f32.mrf.mxu0
        %v1368 = vadd.f32 0.0, %v1367
        %1369 = vmatmul.bf16.gmra.mxu0 %v807
        %v1370 = vpop.f32.mrf.mxu0
        %v1371 = vadd.f32 0.0, %v1370
        %v1372 = vpop.f32.mrf.mxu0
        %v1373 = vadd.f32 0.0, %v1372
        %1374 = vmatmul.bf16.gmra.mxu0 %v810
        %v1375 = vpop.f32.mrf.mxu0
        %v1376 = vadd.f32 0.0, %v1375
        %v1377 = vpop.f32.mrf.mxu0
        %v1378 = vadd.f32 0.0, %v1377
        %1379 = vmatmul.bf16.gmra.mxu0 %v813
        %v1380 = vpop.f32.mrf.mxu0
        %v1381 = vadd.f32 0.0, %v1380
        %v1382 = vpop.f32.mrf.mxu0
        %v1383 = vadd.f32 0.0, %v1382
        %1384 = vmatmul.bf16.gmra.mxu0 %v816
        %v1385 = vpop.f32.mrf.mxu0
        %v1386 = vadd.f32 0.0, %v1385
        %v1387 = vpop.f32.mrf.mxu0
        %v1388 = vadd.f32 0.0, %v1387
        %1389 = vmatmul.bf16.gmra.mxu0 %v1083
        %v1390 = vpop.f32.mrf.mxu0
        %v1391 = vadd.f32 0.0, %v1390
        %v1392 = vpop.f32.mrf.mxu0
        %v1393 = vadd.f32 0.0, %v1392
        %1394 = vmatmul.bf16.gmra.mxu0 %v1346
        %v1395 = vpop.f32.mrf.mxu0
        %v1396 = vadd.f32 0.0, %v1395
        %v1397 = vpop.f32.mrf.mxu0
        %v1398 = vadd.f32 0.0, %v1397
        %1399 = vdwg.mxu0
        %v1400 = vadd.f32 %v1317, %v1361
        %v1401 = vadd.f32 %v1318, %v1363
        %v1402 = vadd.f32 %v1319, %v1366
        %v1403 = vadd.f32 %v1320, %v1368
        %v1404 = vadd.f32 %v1321, %v1371
        %v1405 = vadd.f32 %v1322, %v1373
        %v1406 = vadd.f32 %v1323, %v1376
        %v1407 = vadd.f32 %v1324, %v1378
        %v1408 = vadd.f32 %v1325, %v1381
        %v1409 = vadd.f32 %v1326, %v1383
        %v1410 = vadd.f32 %v1327, %v1386
        %v1411 = vadd.f32 %v1328, %v1388
        %v1412 = vadd.f32 %v1329, %v1391
        %v1413 = vadd.f32 %v1330, %v1393
        %v1414 = vadd.f32 %v1331, %v1396
        %v1415 = vadd.f32 %v1332, %v1398
        %v1416 = vld [vmem:[%s2] sm:$0x1]
        %v1417 = vunpack.c.l.bf16 %v1416
        %v1418 = vperm.slane %v1417, 0
        %v1419 = vadd.f32 %v1400, %v1418
        %v1420 = vadd.f32 %v1401, %v1418
        %v1421 = vadd.f32 %v1402, %v1418
        %v1422 = vadd.f32 %v1403, %v1418
        %v1423 = vadd.f32 %v1404, %v1418
        %v1424 = vadd.f32 %v1405, %v1418
        %v1425 = vadd.f32 %v1406, %v1418
        %v1426 = vadd.f32 %v1407, %v1418
        %v1427 = vadd.f32 %v1408, %v1418
        %v1428 = vadd.f32 %v1409, %v1418
        %v1429 = vadd.f32 %v1410, %v1418
        %v1430 = vadd.f32 %v1411, %v1418
        %v1431 = vadd.f32 %v1412, %v1418
        %v1432 = vadd.f32 %v1413, %v1418
        %v1433 = vadd.f32 %v1414, %v1418
        %v1434 = vadd.f32 %v1415, %v1418
        %v1435 = vmax.f32 %v1419, 0.0
        %v1436 = vmax.f32 %v1420, 0.0
        %v1437 = vmax.f32 %v1421, 0.0
        %v1438 = vmax.f32 %v1422, 0.0
        %v1439 = vmax.f32 %v1423, 0.0
        %v1440 = vmax.f32 %v1424, 0.0
        %v1441 = vmax.f32 %v1425, 0.0
        %v1442 = vmax.f32 %v1426, 0.0
        %v1443 = vmax.f32 %v1427, 0.0
        %v1444 = vmax.f32 %v1428, 0.0
        %v1445 = vmax.f32 %v1429, 0.0
        %v1446 = vmax.f32 %v1430, 0.0
        %v1447 = vmax.f32 %v1431, 0.0
        %v1448 = vmax.f32 %v1432, 0.0
        %v1449 = vmax.f32 %v1433, 0.0
        %v1450 = vmax.f32 %v1434, 0.0
        %v1451 = vld [vmem:[%s3] sm:$0xf]
        %v1452 = vld [vmem:[%s3 + $0x4] sm:$0xf]
        %v1453 = vld [vmem:[%s3 + $0x8] sm:$0xf]
        %v1454 = vld [vmem:[%s3 + $0xc] sm:$0xf]
        %v1455 = vld [vmem:[%s3 + $0x10] sm:$0xf]
        %v1456 = vld [vmem:[%s3 + $0x14] sm:$0xf]
        %v1457 = vld [vmem:[%s3 + $0x18] sm:$0xf]
        %v1458 = vld [vmem:[%s3 + $0x1c] sm:$0xf]
        %v1459 = vld [vmem:[%s3 + $0x20] sm:$0xf]
        %v1460 = vld [vmem:[%s3 + $0x24] sm:$0xf]
        %v1461 = vld [vmem:[%s3 + $0x28] sm:$0xf]
        %v1462 = vld [vmem:[%s3 + $0x2c] sm:$0xf]
        %v1463 = vld [vmem:[%s3 + $0x30] sm:$0xf]
        %v1464 = vld [vmem:[%s3 + $0x34] sm:$0xf]
        %v1465 = vld [vmem:[%s3 + $0x38] sm:$0xf]
        %v1466 = vld [vmem:[%s3 + $0x3c] sm:$0xf]
        %v1467 = vunpack.c.l.bf16 %v1451
        %v1468 = vunpack.c.l.bf16 %v1452
        %v1469 = vunpack.c.l.bf16 %v1453
        %v1470 = vunpack.c.l.bf16 %v1454
        %v1471 = vunpack.c.l.bf16 %v1455
        %v1472 = vunpack.c.l.bf16 %v1456
        %v1473 = vunpack.c.l.bf16 %v1457
        %v1474 = vunpack.c.l.bf16 %v1458
        %v1475 = vunpack.c.l.bf16 %v1459
        %v1476 = vunpack.c.l.bf16 %v1460
        %v1477 = vunpack.c.l.bf16 %v1461
        %v1478 = vunpack.c.l.bf16 %v1462
        %v1479 = vunpack.c.l.bf16 %v1463
        %v1480 = vunpack.c.l.bf16 %v1464
        %v1481 = vunpack.c.l.bf16 %v1465
        %v1482 = vunpack.c.l.bf16 %v1466
        %v1483 = vld [vmem:[%s4] sm:$0x1]
        %v1484 = vunpack.c.l.bf16 %v1483
        %v1485 = vperm.slane %v1484, 0
        %1486 = vmatpush.msra.mxu0 %v1482
        %1487 = vmatpush.msra.mxu0 %v1481
        %1488 = vmatpush.msra.mxu0 %v1480
        %1489 = vmatpush.msra.mxu0 %v1479
        %1490 = vmatpush.msra.mxu0 %v1478
        %1491 = vmatpush.msra.mxu0 %v1477
        %1492 = vmatpush.msra.mxu0 %v1476
        %1493 = vmatpush.msra.mxu0 %v1475
        %1494 = vmatpush.msra.mxu0 %v1474
        %1495 = vmatpush.msra.mxu0 %v1473
        %1496 = vmatpush.msra.mxu0 %v1472
        %1497 = vmatpush.msra.mxu0 %v1471
        %1498 = vmatpush.msra.mxu0 %v1470
        %1499 = vmatpush.msra.mxu0 %v1469
        %1500 = vmatpush.msra.mxu0 %v1468
        %1501 = vmatpush.msra.mxu0 %v1467
        %1502 = vmatmul.f32.gmra.mxu0 %v1435
        %v1503 = vpop.f32.mrf.mxu0
        %v1504 = vadd.f32 %v1485, %v1503
        %1505 = vmatmul.f32.gmra.mxu0 %v1436
        %v1506 = vpop.f32.mrf.mxu0
        %v1507 = vadd.f32 %v1485, %v1506
        %1508 = vmatmul.f32.gmra.mxu0 %v1437
        %v1509 = vpop.f32.mrf.mxu0
        %v1510 = vadd.f32 %v1485, %v1509
        %1511 = vmatmul.f32.gmra.mxu0 %v1438
        %v1512 = vpop.f32.mrf.mxu0
        %v1513 = vadd.f32 %v1485, %v1512
        %1514 = vmatmul.f32.gmra.mxu0 %v1439
        %v1515 = vpop.f32.mrf.mxu0
        %v1516 = vadd.f32 %v1485, %v1515
        %1517 = vmatmul.f32.gmra.mxu0 %v1440
        %v1518 = vpop.f32.mrf.mxu0
        %v1519 = vadd.f32 %v1485, %v1518
        %1520 = vmatmul.f32.gmra.mxu0 %v1441
        %v1521 = vpop.f32.mrf.mxu0
        %v1522 = vadd.f32 %v1485, %v1521
        %1523 = vmatmul.f32.gmra.mxu0 %v1442
        %v1524 = vpop.f32.mrf.mxu0
        %v1525 = vadd.f32 %v1485, %v1524
        %1526 = vmatmul.f32.gmra.mxu0 %v1443
        %v1527 = vpop.f32.mrf.mxu0
        %v1528 = vadd.f32 %v1485, %v1527
        %1529 = vmatmul.f32.gmra.mxu0 %v1444
        %v1530 = vpop.f32.mrf.mxu0
        %v1531 = vadd.f32 %v1485, %v1530
        %1532 = vmatmul.f32.gmra.mxu0 %v1445
        %v1533 = vpop.f32.mrf.mxu0
        %v1534 = vadd.f32 %v1485, %v1533
        %1535 = vmatmul.f32.gmra.mxu0 %v1446
        %v1536 = vpop.f32.mrf.mxu0
        %v1537 = vadd.f32 %v1485, %v1536
        %1538 = vmatmul.f32.gmra.mxu0 %v1447
        %v1539 = vpop.f32.mrf.mxu0
        %v1540 = vadd.f32 %v1485, %v1539
        %1541 = vmatmul.f32.gmra.mxu0 %v1448
        %v1542 = vpop.f32.mrf.mxu0
        %v1543 = vadd.f32 %v1485, %v1542
        %1544 = vmatmul.f32.gmra.mxu0 %v1449
        %v1545 = vpop.f32.mrf.mxu0
        %v1546 = vadd.f32 %v1485, %v1545
        %1547 = vmatmul.f32.gmra.mxu0 %v1450
        %v1548 = vpop.f32.mrf.mxu0
        %v1549 = vadd.f32 %v1485, %v1548
        %1550 = vdwg.mxu0
        %v1551 = vpack.c.bf16 %v1504, %v1504
        %v1552 = vpack.c.bf16 %v1507, %v1507
        %v1553 = vpack.c.bf16 %v1510, %v1510
        %v1554 = vpack.c.bf16 %v1513, %v1513
        %v1555 = vpack.c.bf16 %v1516, %v1516
        %v1556 = vpack.c.bf16 %v1519, %v1519
        %v1557 = vpack.c.bf16 %v1522, %v1522
        %v1558 = vpack.c.bf16 %v1525, %v1525
        %v1559 = vpack.c.bf16 %v1528, %v1528
        %v1560 = vpack.c.bf16 %v1531, %v1531
        %v1561 = vpack.c.bf16 %v1534, %v1534
        %v1562 = vpack.c.bf16 %v1537, %v1537
        %v1563 = vpack.c.bf16 %v1540, %v1540
        %v1564 = vpack.c.bf16 %v1543, %v1543
        %v1565 = vpack.c.bf16 %v1546, %v1546
        %v1566 = vpack.c.bf16 %v1549, %v1549
        %1567 = vst [vmem:[%s241] sm:$0xf] %v1551
        %1568 = vst [vmem:[%s241 + $0x4] sm:$0xf] %v1552
        %1569 = vst [vmem:[%s241 + $0x8] sm:$0xf] %v1553
        %1570 = vst [vmem:[%s241 + $0xc] sm:$0xf] %v1554
        %1571 = vst [vmem:[%s241 + $0x10] sm:$0xf] %v1555
        %1572 = vst [vmem:[%s241 + $0x14] sm:$0xf] %v1556
        %1573 = vst [vmem:[%s241 + $0x18] sm:$0xf] %v1557
        %1574 = vst [vmem:[%s241 + $0x1c] sm:$0xf] %v1558
        %1575 = vst [vmem:[%s241 + $0x20] sm:$0xf] %v1559
        %1576 = vst [vmem:[%s241 + $0x24] sm:$0xf] %v1560
        %1577 = vst [vmem:[%s241 + $0x28] sm:$0xf] %v1561
        %1578 = vst [vmem:[%s241 + $0x2c] sm:$0xf] %v1562
        %1579 = vst [vmem:[%s241 + $0x30] sm:$0xf] %v1563
        %1580 = vst [vmem:[%s241 + $0x34] sm:$0xf] %v1564
        %1581 = vst [vmem:[%s241 + $0x38] sm:$0xf] %v1565
        %1582 = vst [vmem:[%s241 + $0x3c] sm:$0xf] %v1566
        %s1583 = sand.u32 %s153, 1
        %s1584 = scalar_lea.sflag [#allocation3], %s1583
        %s1585 = sand.u32 %s153, 1
        %s1586 = smul.addr %s1585, 64
        %s1587 = scalar_lea.vmem [#allocation2], %s1586
        // Predicated region
        $region41: #{tpu_custom_call.1} parent=39 // pred_check
          %p1588 = pneg %p163
        $region42: #{tpu_custom_call.1} parent=39 // pred_check_branch
          %1590 = sbr.rel (%p1588) target = $region44
        $region43: #{tpu_custom_call.1} parent=39 // pred_region
          %s1591 = smul.u32 16, %s24
          %1593 = vsyncadd %s1584, 0
          %s1594 = smul.addr %s23, 32
          %s1595 = sadd.s32 %s1591, %s1594
          %s1596 = smul.addr %s1595, 4
          %s1597 = scalar_lea.hbm %s5, %s1596
          %s1598 = sshll.u32 %s1587, 4
          %s1599 = int_to_ptr.vmem [resolvable:$true] %s1598
          %s1600 = sshll.u32 %s1597, 4
          %s1601 = int_to_ptr.hbm [resolvable:$true] %s1600
          %1606 = dma.vmem_to_hbm [thread:$0]  %s1599, 1024, %s1601, %s1584, 64, 64, 4
        $region44: #{tpu_custom_call.1} parent=39 // pred_fallthru
          _
      $region40: #{tpu_custom_call.1} parent=5 // pred_fallthru
        _
      %p1607 = scmp.le.s32.totalorder 2, %s14
      // Predicated region
      $region45: #{tpu_custom_call.1} parent=5 // pred_check
        %p1608 = pneg %p1607
      $region46: #{tpu_custom_call.1} parent=5 // pred_check_branch
        %1610 = sbr.rel (%p1608) target = $region48
      $region47: #{tpu_custom_call.1} parent=5 // pred_region
        %s1611 = ssub.s32 %s14, 2
        // Predicated region
        $region49: #{tpu_custom_call.1} parent=47 // pred_check
          %p1612 = pneg %p169
        $region50: #{tpu_custom_call.1} parent=47 // pred_check_branch
          %1614 = sbr.rel (%p1612) target = $region52
        $region51: #{tpu_custom_call.1} parent=47 // pred_region
          %s1615 = sand.u32 %s154, 1
          %s1616 = scalar_lea.sflag [#allocation3], %s1615
          %s1617 = sand.u32 %s154, 1
          %s1618 = smul.addr %s1617, 64
          %s1619 = scalar_lea.vmem [#allocation2], %s1618
          %1621 = dma.done %s1616, 1024
        $region52: #{tpu_custom_call.1} parent=47 // pred_fallthru
          _
      $region48: #{tpu_custom_call.1} parent=5 // pred_fallthru
        _
    $region6: #{tpu_custom_call.1} parent=1 // loop_footer
      %s18 = sadd.s32 1, %s14
    $region7: #{tpu_custom_call.1} parent=1 // loop_footer_branch
      %13 = sbr.rel target = $region3
    $region8: #{tpu_custom_call.1} parent=1 // loop_exit
      _
    %1622 = vsyncpa [#allocation3], 1
    %s1623 = scalar_lea.sflag [#allocation3], 1
    %1624 = vsyncpa %s1623, 1

</llo_original>
